<compile_context>
chip_gen: v6e
topology: v6e:2x2x1
jax: 0.10.0
libtpu: 0.0.40
codegen_flags: <defaults>
</compile_context>

<pallas_src>
import functools

import jax
import jax.numpy as jnp
from jax import lax
from jax.experimental import pallas as pl
from jax.experimental.pallas import tpu as pltpu

EPS = 1e-5
LANE = 128                        # channel / K dims padded to multiples of this
VMEM_LIMIT = 32 * 1024 * 1024     # explicit scoped-VMEM budget (safe on v5e/v6e/v7x)


def _round_up(x, m):
    return (x + m - 1) // m * m


def _pad2d(x, rows, cols):
    r, c = x.shape
    return jnp.pad(x, ((0, rows - r), (0, cols - c)))


# ------------------------------ Pallas kernels ------------------------------ #

def _conv_stats_kernel(a_ref, w_ref, y_ref, sum_ref, sq_ref):
    """One M-tile of Y = A @ W (bf16 in, f32 acc) + streaming BN stats.

    Y is written back in bf16 (half the HBM traffic); stats are taken from the
    f32 MXU accumulation before the downcast.  Zero-padded rows contribute 0.
    """
    i = pl.program_id(0)

    @pl.when(i == 0)
    def _():
        sum_ref[...] = jnp.zeros_like(sum_ref)
        sq_ref[...] = jnp.zeros_like(sq_ref)

    y = jnp.dot(a_ref[...], w_ref[...], preferred_element_type=jnp.float32)
    sum_ref[...] += jnp.sum(y, axis=0, keepdims=True)
    sq_ref[...] += jnp.sum(y * y, axis=0, keepdims=True)
    y_ref[...] = y.astype(y_ref.dtype)


def _mm_stats_kernel(a_ref, w_ref, sum_ref, sq_ref):
    """Stats-only matmul pass (shortcut 1x1 conv): no (M,P) HBM writeback."""
    i = pl.program_id(0)

    @pl.when(i == 0)
    def _():
        sum_ref[...] = jnp.zeros_like(sum_ref)
        sq_ref[...] = jnp.zeros_like(sq_ref)

    r = jnp.dot(a_ref[...], w_ref[...], preferred_element_type=jnp.float32)
    sum_ref[...] += jnp.sum(r, axis=0, keepdims=True)
    sq_ref[...] += jnp.sum(r * r, axis=0, keepdims=True)


def _bn_relu_kernel(y_ref, sc_ref, sh_ref, o_ref):
    """h1 = relu(y*scale + shift); bf16 in, f32 math, bf16 out."""
    y = y_ref[...].astype(jnp.float32)
    out = jnp.maximum(y * sc_ref[...] + sh_ref[...], 0.0)
    o_ref[...] = out.astype(o_ref.dtype)


def _epilogue_id_kernel(y_ref, r_ref, sc_ref, sh_ref, o_ref):
    """Identity shortcut: out = relu(BN(conv2) + x)."""
    main = y_ref[...].astype(jnp.float32) * sc_ref[...] + sh_ref[...]
    o_ref[...] = jnp.maximum(main + r_ref[...].astype(jnp.float32), 0.0)


def _epilogue_proj_kernel(y_ref, xs_ref, ws_ref, sc_ref, sh_ref,
                          rsc_ref, rsh_ref, o_ref):
    """Projection shortcut fused epilogue.

    Recomputes the cheap 1x1 shortcut matmul in-register (instead of reading a
    pre-materialized (M,P) result from HBM), then
    out = relu(BN(conv2) + BN(shortcut)).
    """
    r = jnp.dot(xs_ref[...], ws_ref[...], preferred_element_type=jnp.float32)
    main = y_ref[...].astype(jnp.float32) * sc_ref[...] + sh_ref[...]
    res = r * rsc_ref[...] + rsh_ref[...]
    o_ref[...] = jnp.maximum(main + res, 0.0)


# ------------------------------ kernel wrappers ----------------------------- #

def _mosaic(dims):
    return pltpu.CompilerParams(dimension_semantics=dims,
                                vmem_limit_bytes=VMEM_LIMIT)


def conv_mm_stats(a_bf16, w_bf16, tm):
    """Tiled (over M) matmul with resident W and streaming per-channel stats."""
    m_pad, k_pad = a_bf16.shape
    p_pad = w_bf16.shape[1]
    return pl.pallas_call(
        _conv_stats_kernel,
        out_shape=(
            jax.ShapeDtypeStruct((m_pad, p_pad), jnp.bfloat16),  # raw conv out
            jax.ShapeDtypeStruct((1, p_pad), jnp.float32),       # sum
            jax.ShapeDtypeStruct((1, p_pad), jnp.float32),       # sum of squares
        ),
        grid_spec=pltpu.PrefetchScalarGridSpec(
            num_scalar_prefetch=0,
            grid=(m_pad // tm,),
            in_specs=[
                pl.BlockSpec((tm, k_pad), lambda i: (i, 0)),      # A tile (stream)
                pl.BlockSpec((k_pad, p_pad), lambda i: (0, 0)),   # W (resident)
            ],
            out_specs=(
                pl.BlockSpec((tm, p_pad), lambda i: (i, 0)),      # Y tile (stream)
                pl.BlockSpec((1, p_pad), lambda i: (0, 0)),       # accumulator
                pl.BlockSpec((1, p_pad), lambda i: (0, 0)),       # accumulator
            ),
        ),
        compiler_params=_mosaic(("arbitrary",)),   # stats reduce over M-tiles
    )(a_bf16, w_bf16)


def mm_stats_only(a_bf16, w_bf16, tm):
    """Per-channel sum / sum-of-squares of A@W without writing A@W to HBM."""
    m_pad, k_pad = a_bf16.shape
    p_pad = w_bf16.shape[1]
    return pl.pallas_call(
        _mm_stats_kernel,
        out_shape=(
            jax.ShapeDtypeStruct((1, p_pad), jnp.float32),
            jax.ShapeDtypeStruct((1, p_pad), jnp.float32),
        ),
        grid_spec=pltpu.PrefetchScalarGridSpec(
            num_scalar_prefetch=0,
            grid=(m_pad // tm,),
            in_specs=[
                pl.BlockSpec((tm, k_pad), lambda i: (i, 0)),
                pl.BlockSpec((k_pad, p_pad), lambda i: (0, 0)),
            ],
            out_specs=(
                pl.BlockSpec((1, p_pad), lambda i: (0, 0)),
                pl.BlockSpec((1, p_pad), lambda i: (0, 0)),
            ),
        ),
        compiler_params=_mosaic(("arbitrary",)),
    )(a_bf16, w_bf16)


def bn_relu(y, scale, shift, *, tm):
    m_pad, p_pad = y.shape
    return pl.pallas_call(
        _bn_relu_kernel,
        out_shape=jax.ShapeDtypeStruct((m_pad, p_pad), jnp.bfloat16),
        grid_spec=pltpu.PrefetchScalarGridSpec(
            num_scalar_prefetch=0,
            grid=(m_pad // tm,),
            in_specs=[
                pl.BlockSpec((tm, p_pad), lambda i: (i, 0)),
                pl.BlockSpec((1, p_pad), lambda i: (0, 0)),   # resident
                pl.BlockSpec((1, p_pad), lambda i: (0, 0)),   # resident
            ],
            out_specs=pl.BlockSpec((tm, p_pad), lambda i: (i, 0)),
        ),
        compiler_params=_mosaic(("parallel",)),
    )(y, scale, shift)


def epilogue_identity(y, r, scale, shift, *, tm):
    m_pad, p_pad = y.shape
    return pl.pallas_call(
        _epilogue_id_kernel,
        out_shape=jax.ShapeDtypeStruct((m_pad, p_pad), jnp.float32),
        grid_spec=pltpu.PrefetchScalarGridSpec(
            num_scalar_prefetch=0,
            grid=(m_pad // tm,),
            in_specs=[
                pl.BlockSpec((tm, p_pad), lambda i: (i, 0)),
                pl.BlockSpec((tm, p_pad), lambda i: (i, 0)),
                pl.BlockSpec((1, p_pad), lambda i: (0, 0)),
                pl.BlockSpec((1, p_pad), lambda i: (0, 0)),
            ],
            out_specs=pl.BlockSpec((tm, p_pad), lambda i: (i, 0)),
        ),
        compiler_params=_mosaic(("parallel",)),
    )(y, r, scale, shift)


def epilogue_projection(y, xs, ws, scale, shift, r_scale, r_shift, *, tm):
    m_pad, p_pad = y.shape
    k_pad = xs.shape[1]
    return pl.pallas_call(
        _epilogue_proj_kernel,
        out_shape=jax.ShapeDtypeStruct((m_pad, p_pad), jnp.float32),
        grid_spec=pltpu.PrefetchScalarGridSpec(
            num_scalar_prefetch=0,
            grid=(m_pad // tm,),
            in_specs=[
                pl.BlockSpec((tm, p_pad), lambda i: (i, 0)),      # conv2 out tile
                pl.BlockSpec((tm, k_pad), lambda i: (i, 0)),      # shortcut input tile
                pl.BlockSpec((k_pad, p_pad), lambda i: (0, 0)),   # shortcut W (resident)
                pl.BlockSpec((1, p_pad), lambda i: (0, 0)),
                pl.BlockSpec((1, p_pad), lambda i: (0, 0)),
                pl.BlockSpec((1, p_pad), lambda i: (0, 0)),
                pl.BlockSpec((1, p_pad), lambda i: (0, 0)),
            ],
            out_specs=pl.BlockSpec((tm, p_pad), lambda i: (i, 0)),
        ),
        compiler_params=_mosaic(("parallel",)),
    )(y, xs, ws, scale, shift, r_scale, r_shift)


# --------------------------------- JAX glue --------------------------------- #

def _im2col3x3(x_nhwc, stride):
    """x: (N,H,W,C) NHWC, pad=1, k=3 -> ((N*Ho*Wo, 9*C), Ho, Wo)."""
    # TODO(synk): replace HBM-materialized im2col (9x input-read inflation) with
    # a halo-aware Pallas conv kernel (9 shifted matmuls accumulated in VMEM).
    n, h, w, c = x_nhwc.shape
    xp = jnp.pad(x_nhwc, ((0, 0), (1, 1), (1, 1), (0, 0)))
    ho = (h + 2 - 3) // stride + 1
    wo = (w + 2 - 3) // stride + 1
    cols = []
    for ky in range(3):
        for kx in range(3):
            cols.append(
                xp[:, ky:ky + (ho - 1) * stride + 1:stride,
                      kx:kx + (wo - 1) * stride + 1:stride, :])
    a = jnp.concatenate(cols, axis=-1)            # (N, Ho, Wo, 9*C)
    return a.reshape(n * ho * wo, 9 * c), ho, wo


def _bn_coeffs(s, ss, m_true, gamma_pad, beta_pad):
    """scale = gamma*rsqrt(var+eps), shift = beta - mean*scale  (all (1,P))."""
    mean = s / m_true
    var = jnp.maximum(ss / m_true - mean * mean, 0.0)
    scale = gamma_pad * lax.rsqrt(var + EPS)     # padded gamma==0 -> scale==0
    shift = beta_pad - mean * scale
    return scale, shift


def init_basic_block_params(key, in_planes, planes, stride):
    """Deterministic synthetic parameters (gamma=1, beta=0 like BN init)."""
    k1, k2, k3 = jax.random.split(key, 3)
    params = {
        # weights stored directly in (kh, kw, cin, cout) = HWIO order
        "w1": 0.1 * jax.random.normal(k1, (3, 3, in_planes, planes), jnp.float32),
        "g1": jnp.ones((planes,), jnp.float32),
        "b1": jnp.zeros((planes,), jnp.float32),
        "w2": 0.1 * jax.random.normal(k2, (3, 3, planes, planes), jnp.float32),
        "g2": jnp.ones((planes,), jnp.float32),
        "b2": jnp.zeros((planes,), jnp.float32),
    }
    if stride != 1 or in_planes != planes:
        params["ws"] = 0.1 * jax.random.normal(k3, (in_planes, planes), jnp.float32)
        params["gs"] = jnp.ones((planes,), jnp.float32)
        params["bs"] = jnp.zeros((planes,), jnp.float32)
    return params


@functools.partial(jax.jit, static_argnames=("stride",))
def basic_block_forward(x_nchw, params, stride):
    """Pallas implementation of BasicBlock.forward (training-mode BN)."""
    # NCHW -> NHWC, bf16 for all matmul operands / large intermediates.
    x = jnp.transpose(x_nchw, (0, 2, 3, 1)).astype(jnp.bfloat16)
    n, h, w, cin = x.shape
    planes = params["w1"].shape[-1]
    p_pad = _round_up(planes, LANE)

    a1, ho, wo = _im2col3x3(x, stride)
    m = n * ho * wo
    # 256-wide M tiles feed the 2x256 MXU on v6e/v7x; 128 is the v5e native dim.
    tm = min(256, _round_up(m, 128))
    m_pad = _round_up(m, tm)

    def pad_gb(g, b):
        return (_pad2d(g.reshape(1, -1), 1, p_pad),
                _pad2d(b.reshape(1, -1), 1, p_pad))

    def prep(a, w_mat):
        k = a.shape[1]
        k_pad = _round_up(k, LANE)
        a_p = _pad2d(a, m_pad, k_pad).astype(jnp.bfloat16)
        w_p = _pad2d(w_mat, k_pad, p_pad).astype(jnp.bfloat16)
        return a_p, w_p

    # --- conv1 (3x3, stride) + bn1 + relu ---
    a1_p, w1_p = prep(a1, params["w1"].reshape(9 * cin, planes))
    y1, s1, ss1 = conv_mm_stats(a1_p, w1_p, tm)
    g1p, b1p = pad_gb(params["g1"], params["b1"])
    sc1, sh1 = _bn_coeffs(s1, ss1, float(m), g1p, b1p)
    h1 = bn_relu(y1, sc1, sh1, tm=tm)                        # bf16 (m_pad, p_pad)
    h1_img = h1[:m, :planes].reshape(n, ho, wo, planes)

    # --- conv2 (3x3, stride 1) + bn2 (normalize deferred to fused epilogue) ---
    a2, _, _ = _im2col3x3(h1_img, 1)
    a2_p, w2_p = prep(a2, params["w2"].reshape(9 * planes, planes))
    y2, s2, ss2 = conv_mm_stats(a2_p, w2_p, tm)
    g2p, b2p = pad_gb(params["g2"], params["b2"])
    sc2, sh2 = _bn_coeffs(s2, ss2, float(m), g2p, b2p)

    # --- shortcut + fused epilogue: BN(conv2) + shortcut + add + ReLU ---
    if stride != 1 or cin != planes:
        xs = x[:, ::stride, ::stride, :].reshape(m, cin)
        xs_p, ws_p = prep(xs, params["ws"])
        s_s, ss_s = mm_stats_only(xs_p, ws_p, tm)            # no (M,P) writeback
        gsp, bsp = pad_gb(params["gs"], params["bs"])
        rsc, rsh = _bn_coeffs(s_s, ss_s, float(m), gsp, bsp)
        out = epilogue_projection(y2, xs_p, ws_p, sc2, sh2, rsc, rsh, tm=tm)
    else:
        r = _pad2d(x.reshape(m, cin), m_pad, p_pad)          # identity residual
        out = epilogue_identity(y2, r, sc2, sh2, tm=tm)

    y = out[:m, :planes].reshape(n, ho, wo, planes)
    return jnp.transpose(y, (0, 3, 1, 2))                    # NHWC -> NCHW


# ----------------------------- pure-JAX reference ---------------------------- #

def _bn_train_ref(y_nhwc, gamma, beta):
    mean = jnp.mean(y_nhwc, axis=(0, 1, 2), keepdims=True)
    var = jnp.mean((y_nhwc - mean) ** 2, axis=(0, 1, 2), keepdims=True)
    return (y_nhwc - mean) * lax.rsqrt(var + EPS) * gamma + beta


def basic_block_ref(x_nchw, params, stride):
    x = jnp.transpose(x_nchw, (0, 2, 3, 1)).astype(jnp.float32)
    dn = ("NHWC", "HWIO", "NHWC")
    h1 = lax.conv_general_dilated(x, params["w1"], (stride, stride),
                                  ((1, 1), (1, 1)), dimension_numbers=dn)
    h1 = jnp.maximum(_bn_train_ref(h1, params["g1"], params["b1"]), 0.0)
    h2 = lax.conv_general_dilated(h1, params["w2"], (1, 1),
                                  ((1, 1), (1, 1)), dimension_numbers=dn)
    h2 = _bn_train_ref(h2, params["g2"], params["b2"])
    cin, planes = x.shape[-1], params["w1"].shape[-1]
    if stride != 1 or cin != planes:
        ws = params["ws"].reshape(1, 1, cin, planes)
        sc = lax.conv_general_dilated(x, ws, (stride, stride),
                                      ((0, 0), (0, 0)), dimension_numbers=dn)
        sc = _bn_train_ref(sc, params["gs"], params["bs"])
    else:
        sc = x
    y = jnp.maximum(h2 + sc, 0.0)
    return jnp.transpose(y, (0, 3, 1, 2))


# ------------------------------------ main ----------------------------------- #

if __name__ == "__main__":
    key = jax.random.PRNGKey(0)
    kx, kp1, kp2 = jax.random.split(key, 3)

    ok = True
    # matmul operands and large intermediates are bf16 (f32 accumulation), so
    # compare with a bf16-scale tolerance; structural errors would be O(1).
    TOL = dict(atol=5e-2, rtol=5e-2)

    # Config A: projection shortcut (stride=2, channel change)
    x = jax.random.normal(kx, (2, 4, 16, 16), jnp.float32)        # NCHW
    params_a = init_basic_block_params(kp1, in_planes=4, planes=8, stride=2)
    y_a = jax.block_until_ready(basic_block_forward(x, params_a, stride=2))
    y_a_ref = basic_block_ref(x, params_a, stride=2)
    ok &= bool(jnp.allclose(y_a, y_a_ref, **TOL))

    # Config B: identity shortcut (stride=1, same channels)
    x_b = jax.random.normal(kx, (2, 8, 16, 16), jnp.float32)      # NCHW
    params_b = init_basic_block_params(kp2, in_planes=8, planes=8, stride=1)
    y_b = jax.block_until_ready(basic_block_forward(x_b, params_b, stride=1))
    y_b_ref = basic_block_ref(x_b, params_b, stride=1)
    ok &= bool(jnp.allclose(y_b, y_b_ref, **TOL))

    if ok:
        print("KERNEL_OK")
    else:
        print("MISMATCH")
</pallas_src>

<mosaic_0001>
module attributes {stable_mosaic.version = 11 : i64} {
  func.func @_conv_stats_kernel(%arg0: i32, %arg1: memref<128x128xbf16, #tpu.memory_space<vmem>>, %arg2: memref<128x128xbf16, #tpu.memory_space<vmem>>, %arg3: memref<128x128xbf16, #tpu.memory_space<vmem>>, %arg4: memref<1x128xf32, #tpu.memory_space<vmem>>, %arg5: memref<1x128xf32, #tpu.memory_space<vmem>>) attributes {dimension_semantics = [#tpu.dimension_semantics<arbitrary>], iteration_bounds = array<i64: 1>, scalar_prefetch = 0 : i64, scratch_operands = 0 : i64, tpu.core_type = #tpu.core_type<tc>, window_params = [{transform_indices = @transform_0, window_bounds = array<i64: 128, 128>}, {pipeline_mode = #tpu.pipeline_mode<synchronous>, transform_indices = @transform_1, window_bounds = array<i64: 128, 128>}, {transform_indices = @transform_2, window_bounds = array<i64: 128, 128>}, {pipeline_mode = #tpu.pipeline_mode<synchronous>, transform_indices = @transform_3, window_bounds = array<i64: 1, 128>}, {pipeline_mode = #tpu.pipeline_mode<synchronous>, transform_indices = @transform_4, window_bounds = array<i64: 1, 128>}]} {
    %c0_i32 = arith.constant 0 : i32
    %0 = arith.cmpi eq, %arg0, %c0_i32 : i32
    %1 = arith.extui %0 : i1 to i32
    %c0_i32_0 = arith.constant 0 : i32
    %2 = arith.cmpi ne, %1, %c0_i32_0 : i32
    scf.if %2 {
      %cst_16 = arith.constant 0.000000e+00 : f32
      %19 = vector.broadcast %cst_16 : f32 to vector<1x128xf32>
      %c0_17 = arith.constant 0 : index
      %c0_18 = arith.constant 0 : index
      %20 = vector.load %arg4[%c0_17, %c0_18] : memref<1x128xf32, #tpu.memory_space<vmem>>, vector<1x128xf32>
      tpu.vector_store %arg4[%c0_17, %c0_18], %19 {strides = array<i32>} : memref<1x128xf32, #tpu.memory_space<vmem>>, vector<1x128xf32>,
      %cst_19 = arith.constant 0.000000e+00 : f32
      %21 = vector.broadcast %cst_19 : f32 to vector<1x128xf32>
      %c0_20 = arith.constant 0 : index
      %c0_21 = arith.constant 0 : index
      %22 = vector.load %arg5[%c0_20, %c0_21] : memref<1x128xf32, #tpu.memory_space<vmem>>, vector<1x128xf32>
      tpu.vector_store %arg5[%c0_20, %c0_21], %21 {strides = array<i32>} : memref<1x128xf32, #tpu.memory_space<vmem>>, vector<1x128xf32>,
    } else {
    }
    %c0 = arith.constant 0 : index
    %c0_1 = arith.constant 0 : index
    %3 = vector.load %arg1[%c0, %c0_1] : memref<128x128xbf16, #tpu.memory_space<vmem>>, vector<128x128xbf16>
    %c0_2 = arith.constant 0 : index
    %c0_3 = arith.constant 0 : index
    %4 = vector.load %arg2[%c0_2, %c0_3] : memref<128x128xbf16, #tpu.memory_space<vmem>>, vector<128x128xbf16>
    %cst = arith.constant dense<0.000000e+00> : vector<128x128xf32>
    %5 = tpu.matmul %3, %4, %cst {dimension_numbers = #tpu.dot_dimension_numbers<[1], [0], [0], [1], [0, 0, 1, 1], [], []>} : vector<128x128xbf16>, vector<128x128xbf16>, vector<128x128xf32> -> vector<128x128xf32>
    %c0_4 = arith.constant 0 : index
    %c0_5 = arith.constant 0 : index
    %6 = vector.load %arg4[%c0_4, %c0_5] : memref<1x128xf32, #tpu.memory_space<vmem>>, vector<1x128xf32>
    %cst_6 = arith.constant dense<0.000000e+00> : vector<128xf32>
    %7 = vector.multi_reduction <add>, %5, %cst_6 [0] : vector<128x128xf32> to vector<128xf32>
    %8 = vector.shape_cast %7 : vector<128xf32> to vector<1x128xf32>
    %9 = arith.addf %6, %8 : vector<1x128xf32>
    %c0_7 = arith.constant 0 : index
    %c0_8 = arith.constant 0 : index
    %10 = vector.load %arg4[%c0_7, %c0_8] : memref<1x128xf32, #tpu.memory_space<vmem>>, vector<1x128xf32>
    tpu.vector_store %arg4[%c0_7, %c0_8], %9 {strides = array<i32>} : memref<1x128xf32, #tpu.memory_space<vmem>>, vector<1x128xf32>,
    %c0_9 = arith.constant 0 : index
    %c0_10 = arith.constant 0 : index
    %11 = vector.load %arg5[%c0_9, %c0_10] : memref<1x128xf32, #tpu.memory_space<vmem>>, vector<1x128xf32>
    %12 = arith.mulf %5, %5 : vector<128x128xf32>
    %cst_11 = arith.constant dense<0.000000e+00> : vector<128xf32>
    %13 = vector.multi_reduction <add>, %12, %cst_11 [0] : vector<128x128xf32> to vector<128xf32>
    %14 = vector.shape_cast %13 : vector<128xf32> to vector<1x128xf32>
    %15 = arith.addf %11, %14 : vector<1x128xf32>
    %c0_12 = arith.constant 0 : index
    %c0_13 = arith.constant 0 : index
    %16 = vector.load %arg5[%c0_12, %c0_13] : memref<1x128xf32, #tpu.memory_space<vmem>>, vector<1x128xf32>
    tpu.vector_store %arg5[%c0_12, %c0_13], %15 {strides = array<i32>} : memref<1x128xf32, #tpu.memory_space<vmem>>, vector<1x128xf32>,
    %17 = arith.truncf %5 : vector<128x128xf32> to vector<128x128xbf16>
    %c0_14 = arith.constant 0 : index
    %c0_15 = arith.constant 0 : index
    %18 = vector.load %arg3[%c0_14, %c0_15] : memref<128x128xbf16, #tpu.memory_space<vmem>>, vector<128x128xbf16>
    tpu.vector_store %arg3[%c0_14, %c0_15], %17 {strides = array<i32>} : memref<128x128xbf16, #tpu.memory_space<vmem>>, vector<128x128xbf16>,
    return
  }
  func.func @transform_0(%arg0: i32) -> (i32, i32) {
    %c0_i32 = arith.constant 0 : i32
    %c0_i32_0 = arith.constant 0 : i32
    return %arg0, %c0_i32 : i32, i32
  }
  func.func @transform_1(%arg0: i32) -> (i32, i32) {
    %c0_i32 = arith.constant 0 : i32
    %c0_i32_0 = arith.constant 0 : i32
    %c0_i32_1 = arith.constant 0 : i32
    return %c0_i32, %c0_i32_0 : i32, i32
  }
  func.func @transform_2(%arg0: i32) -> (i32, i32) {
    %c0_i32 = arith.constant 0 : i32
    %c0_i32_0 = arith.constant 0 : i32
    return %arg0, %c0_i32 : i32, i32
  }
  func.func @transform_3(%arg0: i32) -> (i32, i32) {
    %c0_i32 = arith.constant 0 : i32
    %c0_i32_0 = arith.constant 0 : i32
    %c0_i32_1 = arith.constant 0 : i32
    return %c0_i32, %c0_i32_0 : i32, i32
  }
  func.func @transform_4(%arg0: i32) -> (i32, i32) {
    %c0_i32 = arith.constant 0 : i32
    %c0_i32_0 = arith.constant 0 : i32
    %c0_i32_1 = arith.constant 0 : i32
    return %c0_i32, %c0_i32_0 : i32, i32
  }
}

module attributes {stable_mosaic.version = 11 : i64} {
  func.func @_bn_relu_kernel(%arg0: i32, %arg1: memref<128x128xbf16, #tpu.memory_space<vmem>>, %arg2: memref<1x128xf32, #tpu.memory_space<vmem>>, %arg3: memref<1x128xf32, #tpu.memory_space<vmem>>, %arg4: memref<128x128xbf16, #tpu.memory_space<vmem>>) attributes {dimension_semantics = [#tpu.dimension_semantics<parallel>], iteration_bounds = array<i64: 1>, scalar_prefetch = 0 : i64, scratch_operands = 0 : i64, tpu.core_type = #tpu.core_type<tc>, window_params = [{transform_indices = @transform_0, window_bounds = array<i64: 128, 128>}, {pipeline_mode = #tpu.pipeline_mode<synchronous>, transform_indices = @transform_1, window_bounds = array<i64: 1, 128>}, {pipeline_mode = #tpu.pipeline_mode<synchronous>, transform_indices = @transform_2, window_bounds = array<i64: 1, 128>}, {transform_indices = @transform_3, window_bounds = array<i64: 128, 128>}]} {
    %c0 = arith.constant 0 : index
    %c0_0 = arith.constant 0 : index
    %0 = vector.load %arg1[%c0, %c0_0] : memref<128x128xbf16, #tpu.memory_space<vmem>>, vector<128x128xbf16>
    %1 = arith.extf %0 : vector<128x128xbf16> to vector<128x128xf32>
    %c0_1 = arith.constant 0 : index
    %c0_2 = arith.constant 0 : index
    %2 = vector.load %arg2[%c0_1, %c0_2] : memref<1x128xf32, #tpu.memory_space<vmem>>, vector<1x128xf32>
    %3 = vector.broadcast %2 : vector<1x128xf32> to vector<128x128xf32>
    %4 = arith.mulf %1, %3 : vector<128x128xf32>
    %c0_3 = arith.constant 0 : index
    %c0_4 = arith.constant 0 : index
    %5 = vector.load %arg3[%c0_3, %c0_4] : memref<1x128xf32, #tpu.memory_space<vmem>>, vector<1x128xf32>
    %6 = vector.broadcast %5 : vector<1x128xf32> to vector<128x128xf32>
    %7 = arith.addf %4, %6 : vector<128x128xf32>
    %cst = arith.constant 0.000000e+00 : f32
    %8 = vector.broadcast %cst : f32 to vector<128x128xf32>
    %9 = arith.maximumf %7, %8 : vector<128x128xf32>
    %10 = arith.truncf %9 : vector<128x128xf32> to vector<128x128xbf16>
    %c0_5 = arith.constant 0 : index
    %c0_6 = arith.constant 0 : index
    %11 = vector.load %arg4[%c0_5, %c0_6] : memref<128x128xbf16, #tpu.memory_space<vmem>>, vector<128x128xbf16>
    tpu.vector_store %arg4[%c0_5, %c0_6], %10 {strides = array<i32>} : memref<128x128xbf16, #tpu.memory_space<vmem>>, vector<128x128xbf16>,
    return
  }
  func.func @transform_0(%arg0: i32) -> (i32, i32) {
    %c0_i32 = arith.constant 0 : i32
    %c0_i32_0 = arith.constant 0 : i32
    return %arg0, %c0_i32 : i32, i32
  }
  func.func @transform_1(%arg0: i32) -> (i32, i32) {
    %c0_i32 = arith.constant 0 : i32
    %c0_i32_0 = arith.constant 0 : i32
    %c0_i32_1 = arith.constant 0 : i32
    return %c0_i32, %c0_i32_0 : i32, i32
  }
  func.func @transform_2(%arg0: i32) -> (i32, i32) {
    %c0_i32 = arith.constant 0 : i32
    %c0_i32_0 = arith.constant 0 : i32
    %c0_i32_1 = arith.constant 0 : i32
    return %c0_i32, %c0_i32_0 : i32, i32
  }
  func.func @transform_3(%arg0: i32) -> (i32, i32) {
    %c0_i32 = arith.constant 0 : i32
    %c0_i32_0 = arith.constant 0 : i32
    return %arg0, %c0_i32 : i32, i32
  }
}

module attributes {stable_mosaic.version = 11 : i64} {
  func.func @_mm_stats_kernel(%arg0: i32, %arg1: memref<128x128xbf16, #tpu.memory_space<vmem>>, %arg2: memref<128x128xbf16, #tpu.memory_space<vmem>>, %arg3: memref<1x128xf32, #tpu.memory_space<vmem>>, %arg4: memref<1x128xf32, #tpu.memory_space<vmem>>) attributes {dimension_semantics = [#tpu.dimension_semantics<arbitrary>], iteration_bounds = array<i64: 1>, scalar_prefetch = 0 : i64, scratch_operands = 0 : i64, tpu.core_type = #tpu.core_type<tc>, window_params = [{transform_indices = @transform_0, window_bounds = array<i64: 128, 128>}, {pipeline_mode = #tpu.pipeline_mode<synchronous>, transform_indices = @transform_1, window_bounds = array<i64: 128, 128>}, {pipeline_mode = #tpu.pipeline_mode<synchronous>, transform_indices = @transform_2, window_bounds = array<i64: 1, 128>}, {pipeline_mode = #tpu.pipeline_mode<synchronous>, transform_indices = @transform_3, window_bounds = array<i64: 1, 128>}]} {
    %c0_i32 = arith.constant 0 : i32
    %0 = arith.cmpi eq, %arg0, %c0_i32 : i32
    %1 = arith.extui %0 : i1 to i32
    %c0_i32_0 = arith.constant 0 : i32
    %2 = arith.cmpi ne, %1, %c0_i32_0 : i32
    scf.if %2 {
      %cst_14 = arith.constant 0.000000e+00 : f32
      %17 = vector.broadcast %cst_14 : f32 to vector<1x128xf32>
      %c0_15 = arith.constant 0 : index
      %c0_16 = arith.constant 0 : index
      %18 = vector.load %arg3[%c0_15, %c0_16] : memref<1x128xf32, #tpu.memory_space<vmem>>, vector<1x128xf32>
      tpu.vector_store %arg3[%c0_15, %c0_16], %17 {strides = array<i32>} : memref<1x128xf32, #tpu.memory_space<vmem>>, vector<1x128xf32>,
      %cst_17 = arith.constant 0.000000e+00 : f32
      %19 = vector.broadcast %cst_17 : f32 to vector<1x128xf32>
      %c0_18 = arith.constant 0 : index
      %c0_19 = arith.constant 0 : index
      %20 = vector.load %arg4[%c0_18, %c0_19] : memref<1x128xf32, #tpu.memory_space<vmem>>, vector<1x128xf32>
      tpu.vector_store %arg4[%c0_18, %c0_19], %19 {strides = array<i32>} : memref<1x128xf32, #tpu.memory_space<vmem>>, vector<1x128xf32>,
    } else {
    }
    %c0 = arith.constant 0 : index
    %c0_1 = arith.constant 0 : index
    %3 = vector.load %arg1[%c0, %c0_1] : memref<128x128xbf16, #tpu.memory_space<vmem>>, vector<128x128xbf16>
    %c0_2 = arith.constant 0 : index
    %c0_3 = arith.constant 0 : index
    %4 = vector.load %arg2[%c0_2, %c0_3] : memref<128x128xbf16, #tpu.memory_space<vmem>>, vector<128x128xbf16>
    %cst = arith.constant dense<0.000000e+00> : vector<128x128xf32>
    %5 = tpu.matmul %3, %4, %cst {dimension_numbers = #tpu.dot_dimension_numbers<[1], [0], [0], [1], [0, 0, 1, 1], [], []>} : vector<128x128xbf16>, vector<128x128xbf16>, vector<128x128xf32> -> vector<128x128xf32>
    %c0_4 = arith.constant 0 : index
    %c0_5 = arith.constant 0 : index
    %6 = vector.load %arg3[%c0_4, %c0_5] : memref<1x128xf32, #tpu.memory_space<vmem>>, vector<1x128xf32>
    %cst_6 = arith.constant dense<0.000000e+00> : vector<128xf32>
    %7 = vector.multi_reduction <add>, %5, %cst_6 [0] : vector<128x128xf32> to vector<128xf32>
    %8 = vector.shape_cast %7 : vector<128xf32> to vector<1x128xf32>
    %9 = arith.addf %6, %8 : vector<1x128xf32>
    %c0_7 = arith.constant 0 : index
    %c0_8 = arith.constant 0 : index
    %10 = vector.load %arg3[%c0_7, %c0_8] : memref<1x128xf32, #tpu.memory_space<vmem>>, vector<1x128xf32>
    tpu.vector_store %arg3[%c0_7, %c0_8], %9 {strides = array<i32>} : memref<1x128xf32, #tpu.memory_space<vmem>>, vector<1x128xf32>,
    %c0_9 = arith.constant 0 : index
    %c0_10 = arith.constant 0 : index
    %11 = vector.load %arg4[%c0_9, %c0_10] : memref<1x128xf32, #tpu.memory_space<vmem>>, vector<1x128xf32>
    %12 = arith.mulf %5, %5 : vector<128x128xf32>
    %cst_11 = arith.constant dense<0.000000e+00> : vector<128xf32>
    %13 = vector.multi_reduction <add>, %12, %cst_11 [0] : vector<128x128xf32> to vector<128xf32>
    %14 = vector.shape_cast %13 : vector<128xf32> to vector<1x128xf32>
    %15 = arith.addf %11, %14 : vector<1x128xf32>
    %c0_12 = arith.constant 0 : index
    %c0_13 = arith.constant 0 : index
    %16 = vector.load %arg4[%c0_12, %c0_13] : memref<1x128xf32, #tpu.memory_space<vmem>>, vector<1x128xf32>
    tpu.vector_store %arg4[%c0_12, %c0_13], %15 {strides = array<i32>} : memref<1x128xf32, #tpu.memory_space<vmem>>, vector<1x128xf32>,
    return
  }
  func.func @transform_0(%arg0: i32) -> (i32, i32) {
    %c0_i32 = arith.constant 0 : i32
    %c0_i32_0 = arith.constant 0 : i32
    return %arg0, %c0_i32 : i32, i32
  }
  func.func @transform_1(%arg0: i32) -> (i32, i32) {
    %c0_i32 = arith.constant 0 : i32
    %c0_i32_0 = arith.constant 0 : i32
    %c0_i32_1 = arith.constant 0 : i32
    return %c0_i32, %c0_i32_0 : i32, i32
  }
  func.func @transform_2(%arg0: i32) -> (i32, i32) {
    %c0_i32 = arith.constant 0 : i32
    %c0_i32_0 = arith.constant 0 : i32
    %c0_i32_1 = arith.constant 0 : i32
    return %c0_i32, %c0_i32_0 : i32, i32
  }
  func.func @transform_3(%arg0: i32) -> (i32, i32) {
    %c0_i32 = arith.constant 0 : i32
    %c0_i32_0 = arith.constant 0 : i32
    %c0_i32_1 = arith.constant 0 : i32
    return %c0_i32, %c0_i32_0 : i32, i32
  }
}

module attributes {stable_mosaic.version = 11 : i64} {
  func.func @_epilogue_proj_kernel(%arg0: i32, %arg1: memref<128x128xbf16, #tpu.memory_space<vmem>>, %arg2: memref<128x128xbf16, #tpu.memory_space<vmem>>, %arg3: memref<128x128xbf16, #tpu.memory_space<vmem>>, %arg4: memref<1x128xf32, #tpu.memory_space<vmem>>, %arg5: memref<1x128xf32, #tpu.memory_space<vmem>>, %arg6: memref<1x128xf32, #tpu.memory_space<vmem>>, %arg7: memref<1x128xf32, #tpu.memory_space<vmem>>, %arg8: memref<128x128xf32, #tpu.memory_space<vmem>>) attributes {dimension_semantics = [#tpu.dimension_semantics<parallel>], iteration_bounds = array<i64: 1>, scalar_prefetch = 0 : i64, scratch_operands = 0 : i64, tpu.core_type = #tpu.core_type<tc>, window_params = [{transform_indices = @transform_0, window_bounds = array<i64: 128, 128>}, {transform_indices = @transform_1, window_bounds = array<i64: 128, 128>}, {pipeline_mode = #tpu.pipeline_mode<synchronous>, transform_indices = @transform_2, window_bounds = array<i64: 128, 128>}, {pipeline_mode = #tpu.pipeline_mode<synchronous>, transform_indices = @transform_3, window_bounds = array<i64: 1, 128>}, {pipeline_mode = #tpu.pipeline_mode<synchronous>, transform_indices = @transform_4, window_bounds = array<i64: 1, 128>}, {pipeline_mode = #tpu.pipeline_mode<synchronous>, transform_indices = @transform_5, window_bounds = array<i64: 1, 128>}, {pipeline_mode = #tpu.pipeline_mode<synchronous>, transform_indices = @transform_6, window_bounds = array<i64: 1, 128>}, {transform_indices = @transform_7, window_bounds = array<i64: 128, 128>}]} {
    %c0 = arith.constant 0 : index
    %c0_0 = arith.constant 0 : index
    %0 = vector.load %arg2[%c0, %c0_0] : memref<128x128xbf16, #tpu.memory_space<vmem>>, vector<128x128xbf16>
    %c0_1 = arith.constant 0 : index
    %c0_2 = arith.constant 0 : index
    %1 = vector.load %arg3[%c0_1, %c0_2] : memref<128x128xbf16, #tpu.memory_space<vmem>>, vector<128x128xbf16>
    %cst = arith.constant dense<0.000000e+00> : vector<128x128xf32>
    %2 = tpu.matmul %0, %1, %cst {dimension_numbers = #tpu.dot_dimension_numbers<[1], [0], [0], [1], [0, 0, 1, 1], [], []>} : vector<128x128xbf16>, vector<128x128xbf16>, vector<128x128xf32> -> vector<128x128xf32>
    %c0_3 = arith.constant 0 : index
    %c0_4 = arith.constant 0 : index
    %3 = vector.load %arg1[%c0_3, %c0_4] : memref<128x128xbf16, #tpu.memory_space<vmem>>, vector<128x128xbf16>
    %4 = arith.extf %3 : vector<128x128xbf16> to vector<128x128xf32>
    %c0_5 = arith.constant 0 : index
    %c0_6 = arith.constant 0 : index
    %5 = vector.load %arg4[%c0_5, %c0_6] : memref<1x128xf32, #tpu.memory_space<vmem>>, vector<1x128xf32>
    %6 = vector.broadcast %5 : vector<1x128xf32> to vector<128x128xf32>
    %7 = arith.mulf %4, %6 : vector<128x128xf32>
    %c0_7 = arith.constant 0 : index
    %c0_8 = arith.constant 0 : index
    %8 = vector.load %arg5[%c0_7, %c0_8] : memref<1x128xf32, #tpu.memory_space<vmem>>, vector<1x128xf32>
    %9 = vector.broadcast %8 : vector<1x128xf32> to vector<128x128xf32>
    %10 = arith.addf %7, %9 : vector<128x128xf32>
    %c0_9 = arith.constant 0 : index
    %c0_10 = arith.constant 0 : index
    %11 = vector.load %arg6[%c0_9, %c0_10] : memref<1x128xf32, #tpu.memory_space<vmem>>, vector<1x128xf32>
    %12 = vector.broadcast %11 : vector<1x128xf32> to vector<128x128xf32>
    %13 = arith.mulf %2, %12 : vector<128x128xf32>
    %c0_11 = arith.constant 0 : index
    %c0_12 = arith.constant 0 : index
    %14 = vector.load %arg7[%c0_11, %c0_12] : memref<1x128xf32, #tpu.memory_space<vmem>>, vector<1x128xf32>
    %15 = vector.broadcast %14 : vector<1x128xf32> to vector<128x128xf32>
    %16 = arith.addf %13, %15 : vector<128x128xf32>
    %17 = arith.addf %10, %16 : vector<128x128xf32>
    %cst_13 = arith.constant 0.000000e+00 : f32
    %18 = vector.broadcast %cst_13 : f32 to vector<128x128xf32>
    %19 = arith.maximumf %17, %18 : vector<128x128xf32>
    %c0_14 = arith.constant 0 : index
    %c0_15 = arith.constant 0 : index
    %20 = vector.load %arg8[%c0_14, %c0_15] : memref<128x128xf32, #tpu.memory_space<vmem>>, vector<128x128xf32>
    tpu.vector_store %arg8[%c0_14, %c0_15], %19 {strides = array<i32>} : memref<128x128xf32, #tpu.memory_space<vmem>>, vector<128x128xf32>,
    return
  }
  func.func @transform_0(%arg0: i32) -> (i32, i32) {
    %c0_i32 = arith.constant 0 : i32
    %c0_i32_0 = arith.constant 0 : i32
    return %arg0, %c0_i32 : i32, i32
  }
  func.func @transform_1(%arg0: i32) -> (i32, i32) {
    %c0_i32 = arith.constant 0 : i32
    %c0_i32_0 = arith.constant 0 : i32
    return %arg0, %c0_i32 : i32, i32
  }
  func.func @transform_2(%arg0: i32) -> (i32, i32) {
    %c0_i32 = arith.constant 0 : i32
    %c0_i32_0 = arith.constant 0 : i32
    %c0_i32_1 = arith.constant 0 : i32
    return %c0_i32, %c0_i32_0 : i32, i32
  }
  func.func @transform_3(%arg0: i32) -> (i32, i32) {
    %c0_i32 = arith.constant 0 : i32
    %c0_i32_0 = arith.constant 0 : i32
    %c0_i32_1 = arith.constant 0 : i32
    return %c0_i32, %c0_i32_0 : i32, i32
  }
  func.func @transform_4(%arg0: i32) -> (i32, i32) {
    %c0_i32 = arith.constant 0 : i32
    %c0_i32_0 = arith.constant 0 : i32
    %c0_i32_1 = arith.constant 0 : i32
    return %c0_i32, %c0_i32_0 : i32, i32
  }
  func.func @transform_5(%arg0: i32) -> (i32, i32) {
    %c0_i32 = arith.constant 0 : i32
    %c0_i32_0 = arith.constant 0 : i32
    %c0_i32_1 = arith.constant 0 : i32
    return %c0_i32, %c0_i32_0 : i32, i32
  }
  func.func @transform_6(%arg0: i32) -> (i32, i32) {
    %c0_i32 = arith.constant 0 : i32
    %c0_i32_0 = arith.constant 0 : i32
    %c0_i32_1 = arith.constant 0 : i32
    return %c0_i32, %c0_i32_0 : i32, i32
  }
  func.func @transform_7(%arg0: i32) -> (i32, i32) {
    %c0_i32 = arith.constant 0 : i32
    %c0_i32_0 = arith.constant 0 : i32
    return %arg0, %c0_i32 : i32, i32
  }
}

</mosaic_0001>

<llo_original>
// kernel: basic_block_forward.6
$region0: #{basic_block_forward.6}
  #allocation0 [shape = 'u32[]', space=smem, size = 0x4, offset = 0x4, fixed_abs, tag = 'smem constant byte address 0x4 - core index']
  #allocation1 [shape = 'u32[144,128]{1,0:T(1,128)}', space=vmem, size = 0x12000, scoped, tag = 'internal scratch']
  %s0 = inlined_call_operand.vmem [shape: bf16[128,128], index: 0, kind: input, shape index: {}]
  %s1 = inlined_call_operand.vmem [shape: f32[1,128], index: 1, kind: input, shape index: {}]
  %s2 = inlined_call_operand.vmem [shape: f32[1,128], index: 2, kind: input, shape index: {}]
  %s3 = inlined_call_operand.vmem [shape: bf16[128,128], index: 3, kind: output, shape index: {}]
  %s4 = sld [smem:[#allocation0]]
  $region22: #{basic_block_forward.6} parent=0
    _
  %s6 = ssub.s32 1, %s4
  %s7 = scalar_select 0, %s6, %s4
  // Predicated region
  $region2: #{basic_block_forward.6} parent=0 // pred_check
    _
  $region3: #{basic_block_forward.6} parent=0 // pred_check_branch
    %9 = sbr.rel (0) target = $region5
  $region4: #{basic_block_forward.6} parent=0 // pred_region
    _
  $region5: #{basic_block_forward.6} parent=0 // pred_fallthru
    _
  // Predicated region
  $region6: #{basic_block_forward.6} parent=0 // pred_check
    _
  $region7: #{basic_block_forward.6} parent=0 // pred_check_branch
    %11 = sbr.rel (0) target = $region9
  $region8: #{basic_block_forward.6} parent=0 // pred_region
    _
  $region9: #{basic_block_forward.6} parent=0 // pred_fallthru
    _
  // Predicated region
  $region10: #{basic_block_forward.6} parent=0 // pred_check
    _
  $region11: #{basic_block_forward.6} parent=0 // pred_check_branch
    %13 = sbr.rel (0) target = $region13
  $region12: #{basic_block_forward.6} parent=0 // pred_region
    _
  $region13: #{basic_block_forward.6} parent=0 // pred_fallthru
    _
  %v14 = vld [vmem:[%s0] sm:$0xf]
  %v15 = vld [vmem:[%s0 + $0x4] sm:$0xf]
  %v16 = vld [vmem:[%s0 + $0x8] sm:$0xf]
  %v17 = vld [vmem:[%s0 + $0xc] sm:$0xf]
  %v18 = vld [vmem:[%s0 + $0x10] sm:$0xf]
  %v19 = vld [vmem:[%s0 + $0x14] sm:$0xf]
  %v20 = vld [vmem:[%s0 + $0x18] sm:$0xf]
  %v21 = vld [vmem:[%s0 + $0x1c] sm:$0xf]
  %v22 = vld [vmem:[%s0 + $0x20] sm:$0xf]
  %v23 = vld [vmem:[%s0 + $0x24] sm:$0xf]
  %v24 = vld [vmem:[%s0 + $0x28] sm:$0xf]
  %v25 = vld [vmem:[%s0 + $0x2c] sm:$0xf]
  %v26 = vld [vmem:[%s0 + $0x30] sm:$0xf]
  %v27 = vld [vmem:[%s0 + $0x34] sm:$0xf]
  %v28 = vld [vmem:[%s0 + $0x38] sm:$0xf]
  %v29 = vld [vmem:[%s0 + $0x3c] sm:$0xf]
  %v30 = vunpack.c.l.bf16 %v14
  %v31 = vunpack.c.l.bf16 %v15
  %v32 = vunpack.c.l.bf16 %v16
  %v33 = vunpack.c.l.bf16 %v17
  %v34 = vunpack.c.l.bf16 %v18
  %v35 = vunpack.c.l.bf16 %v19
  %v36 = vunpack.c.l.bf16 %v20
  %v37 = vunpack.c.l.bf16 %v21
  %v38 = vunpack.c.l.bf16 %v22
  %v39 = vunpack.c.l.bf16 %v23
  %v40 = vunpack.c.l.bf16 %v24
  %v41 = vunpack.c.l.bf16 %v25
  %v42 = vunpack.c.l.bf16 %v26
  %v43 = vunpack.c.l.bf16 %v27
  %v44 = vunpack.c.l.bf16 %v28
  %v45 = vunpack.c.l.bf16 %v29
  %v46 = vld [vmem:[%s1] sm:$0x1]
  %v48 = vlaneseq
  %v49 = vshrl.u32 %v48, 7
  %v50 = vsub.s32 0, %v49
  %v51 = vrot.slane %v46, %v50
  %v53 = vmul.f32 %v30, %v51
  %v54 = vmul.f32 %v31, %v51
  %v55 = vmul.f32 %v32, %v51
  %v56 = vmul.f32 %v33, %v51
  %v57 = vmul.f32 %v34, %v51
  %v58 = vmul.f32 %v35, %v51
  %v59 = vmul.f32 %v36, %v51
  %v60 = vmul.f32 %v37, %v51
  %v61 = vmul.f32 %v38, %v51
  %v62 = vmul.f32 %v39, %v51
  %v63 = vmul.f32 %v40, %v51
  %v64 = vmul.f32 %v41, %v51
  %v65 = vmul.f32 %v42, %v51
  %v66 = vmul.f32 %v43, %v51
  %v67 = vmul.f32 %v44, %v51
  %v68 = vmul.f32 %v45, %v51
  %v69 = vld [vmem:[%s2] sm:$0x1]
  %v71 = vlaneseq
  %v72 = vshrl.u32 %v71, 7
  %v73 = vsub.s32 0, %v72
  %v74 = vrot.slane %v69, %v73
  %v76 = vadd.f32 %v53, %v74
  %v77 = vadd.f32 %v54, %v74
  %v78 = vadd.f32 %v55, %v74
  %v79 = vadd.f32 %v56, %v74
  %v80 = vadd.f32 %v57, %v74
  %v81 = vadd.f32 %v58, %v74
  %v82 = vadd.f32 %v59, %v74
  %v83 = vadd.f32 %v60, %v74
  %v84 = vadd.f32 %v61, %v74
  %v85 = vadd.f32 %v62, %v74
  %v86 = vadd.f32 %v63, %v74
  %v87 = vadd.f32 %v64, %v74
  %v88 = vadd.f32 %v65, %v74
  %v89 = vadd.f32 %v66, %v74
  %v90 = vadd.f32 %v67, %v74
  %v91 = vadd.f32 %v68, %v74
  %v92 = vmax.f32 %v76, 0.0
  %v93 = vmax.f32 %v77, 0.0
  %v94 = vmax.f32 %v78, 0.0
  %v95 = vmax.f32 %v79, 0.0
  %v96 = vmax.f32 %v80, 0.0
  %v97 = vmax.f32 %v81, 0.0
  %v98 = vmax.f32 %v82, 0.0
  %v99 = vmax.f32 %v83, 0.0
  %v100 = vmax.f32 %v84, 0.0
  %v101 = vmax.f32 %v85, 0.0
  %v102 = vmax.f32 %v86, 0.0
  %v103 = vmax.f32 %v87, 0.0
  %v104 = vmax.f32 %v88, 0.0
  %v105 = vmax.f32 %v89, 0.0
  %v106 = vmax.f32 %v90, 0.0
  %v107 = vmax.f32 %v91, 0.0
  %v108 = vpack.c.bf16 %v93, %v92
  %v109 = vpack.c.bf16 %v95, %v94
  %v110 = vpack.c.bf16 %v97, %v96
  %v111 = vpack.c.bf16 %v99, %v98
  %v112 = vpack.c.bf16 %v101, %v100
  %v113 = vpack.c.bf16 %v103, %v102
  %v114 = vpack.c.bf16 %v105, %v104
  %v115 = vpack.c.bf16 %v107, %v106
  %v124 = vunpack.c.l.b16 %v108
  %v125 = vunpack.c.h.b16 %v108
  %v126 = vunpack.c.l.b16 %v109
  %v127 = vunpack.c.h.b16 %v109
  %v128 = vunpack.c.l.b16 %v110
  %v129 = vunpack.c.h.b16 %v110
  %v130 = vunpack.c.l.b16 %v111
  %v131 = vunpack.c.h.b16 %v111
  %v132 = vunpack.c.l.b16 %v112
  %v133 = vunpack.c.h.b16 %v112
  %v134 = vunpack.c.l.b16 %v113
  %v135 = vunpack.c.h.b16 %v113
  %v136 = vunpack.c.l.b16 %v114
  %v137 = vunpack.c.h.b16 %v114
  %v138 = vunpack.c.l.b16 %v115
  %v139 = vunpack.c.h.b16 %v115
  %v140 = vpack.c.b16 %v124, %v124
  %v141 = vpack.c.b16 %v125, %v125
  %v142 = vpack.c.b16 %v126, %v126
  %v143 = vpack.c.b16 %v127, %v127
  %v144 = vpack.c.b16 %v128, %v128
  %v145 = vpack.c.b16 %v129, %v129
  %v146 = vpack.c.b16 %v130, %v130
  %v147 = vpack.c.b16 %v131, %v131
  %v148 = vpack.c.b16 %v132, %v132
  %v149 = vpack.c.b16 %v133, %v133
  %v150 = vpack.c.b16 %v134, %v134
  %v151 = vpack.c.b16 %v135, %v135
  %v152 = vpack.c.b16 %v136, %v136
  %v153 = vpack.c.b16 %v137, %v137
  %v154 = vpack.c.b16 %v138, %v138
  %v155 = vpack.c.b16 %v139, %v139
  %172 = vst [vmem:[%s3] sm:$0xf] %v140
  %173 = vst [vmem:[%s3 + $0x4] sm:$0xf] %v141
  %174 = vst [vmem:[%s3 + $0x8] sm:$0xf] %v142
  %175 = vst [vmem:[%s3 + $0xc] sm:$0xf] %v143
  %176 = vst [vmem:[%s3 + $0x10] sm:$0xf] %v144
  %177 = vst [vmem:[%s3 + $0x14] sm:$0xf] %v145
  %178 = vst [vmem:[%s3 + $0x18] sm:$0xf] %v146
  %179 = vst [vmem:[%s3 + $0x1c] sm:$0xf] %v147
  %180 = vst [vmem:[%s3 + $0x20] sm:$0xf] %v148
  %181 = vst [vmem:[%s3 + $0x24] sm:$0xf] %v149
  %182 = vst [vmem:[%s3 + $0x28] sm:$0xf] %v150
  %183 = vst [vmem:[%s3 + $0x2c] sm:$0xf] %v151
  %184 = vst [vmem:[%s3 + $0x30] sm:$0xf] %v152
  %185 = vst [vmem:[%s3 + $0x34] sm:$0xf] %v153
  %186 = vst [vmem:[%s3 + $0x38] sm:$0xf] %v154
  %187 = vst [vmem:[%s3 + $0x3c] sm:$0xf] %v155
  // Predicated region
  $region14: #{basic_block_forward.6} parent=0 // pred_check
    _
  $region15: #{basic_block_forward.6} parent=0 // pred_check_branch
    %189 = sbr.rel (0) target = $region17
  $region16: #{basic_block_forward.6} parent=0 // pred_region
    _
  $region17: #{basic_block_forward.6} parent=0 // pred_fallthru
    _
  // Predicated region
  $region18: #{basic_block_forward.6} parent=0 // pred_check
    _
  $region19: #{basic_block_forward.6} parent=0 // pred_check_branch
    %191 = sbr.rel (0) target = $region21
  $region20: #{basic_block_forward.6} parent=0 // pred_region
    _
  $region21: #{basic_block_forward.6} parent=0 // pred_fallthru
    _

// kernel: basic_block_forward.5
$region0: #{basic_block_forward.5}
  #allocation0 [shape = 'u32[]', space=smem, size = 0x4, offset = 0x4, fixed_abs, tag = 'smem constant byte address 0x4 - core index']
  #allocation1 [shape = 'u32[144,128]{1,0:T(1,128)}', space=vmem, size = 0x12000, scoped, tag = 'internal scratch']
  %s0 = inlined_call_operand.vmem [shape: bf16[128,128], index: 0, kind: input, shape index: {}]
  %s1 = inlined_call_operand.vmem [shape: bf16[128,128], index: 1, kind: input, shape index: {}]
  %s2 = inlined_call_operand.vmem [shape: bf16[128,128], index: 2, kind: output, shape index: {0}]
  %s3 = inlined_call_operand.vmem [shape: f32[1,128], index: 3, kind: output, shape index: {1}]
  %s4 = inlined_call_operand.vmem [shape: f32[1,128], index: 4, kind: output, shape index: {2}]
  %5 = xla_tuple %s2, %s3, %s4
  %s6 = sld [smem:[#allocation0]]
  $region38: #{basic_block_forward.5} parent=0
    _
  %s8 = ssub.s32 1, %s6
  %s9 = scalar_select 0, %s8, %s6
  // Predicated region
  $region2: #{basic_block_forward.5} parent=0 // pred_check
    _
  $region3: #{basic_block_forward.5} parent=0 // pred_check_branch
    %11 = sbr.rel (0) target = $region5
  $region4: #{basic_block_forward.5} parent=0 // pred_region
    _
  $region5: #{basic_block_forward.5} parent=0 // pred_fallthru
    _
  // Predicated region
  $region6: #{basic_block_forward.5} parent=0 // pred_check
    _
  $region7: #{basic_block_forward.5} parent=0 // pred_check_branch
    %13 = sbr.rel (0) target = $region9
  $region8: #{basic_block_forward.5} parent=0 // pred_region
    _
  $region9: #{basic_block_forward.5} parent=0 // pred_fallthru
    _
  %p15 = scmp.eq.s32.totalorder 0, 0
  // Predicated region
  $region10: #{basic_block_forward.5} parent=0 // pred_check
    %p16 = pneg %p15
  $region11: #{basic_block_forward.5} parent=0 // pred_check_branch
    %18 = sbr.rel (%p16) target = $region13
  $region12: #{basic_block_forward.5} parent=0 // pred_region
    %19 = vst [vmem:[%s3] sm:$0x1] 0.0
    %20 = vst [vmem:[%s4] sm:$0x1] 0.0
  $region13: #{basic_block_forward.5} parent=0 // pred_fallthru
    _
  %v21 = vld [vmem:[%s0] sm:$0xf]
  %v22 = vld [vmem:[%s0 + $0x4] sm:$0xf]
  %v23 = vld [vmem:[%s0 + $0x8] sm:$0xf]
  %v24 = vld [vmem:[%s0 + $0xc] sm:$0xf]
  %v25 = vld [vmem:[%s0 + $0x10] sm:$0xf]
  %v26 = vld [vmem:[%s0 + $0x14] sm:$0xf]
  %v27 = vld [vmem:[%s0 + $0x18] sm:$0xf]
  %v28 = vld [vmem:[%s0 + $0x1c] sm:$0xf]
  %v29 = vld [vmem:[%s0 + $0x20] sm:$0xf]
  %v30 = vld [vmem:[%s0 + $0x24] sm:$0xf]
  %v31 = vld [vmem:[%s0 + $0x28] sm:$0xf]
  %v32 = vld [vmem:[%s0 + $0x2c] sm:$0xf]
  %v33 = vld [vmem:[%s0 + $0x30] sm:$0xf]
  %v34 = vld [vmem:[%s0 + $0x34] sm:$0xf]
  %v35 = vld [vmem:[%s0 + $0x38] sm:$0xf]
  %v36 = vld [vmem:[%s0 + $0x3c] sm:$0xf]
  %v37 = vld [vmem:[%s1] sm:$0xf]
  %v38 = vld [vmem:[%s1 + $0x4] sm:$0xf]
  %v39 = vld [vmem:[%s1 + $0x8] sm:$0xf]
  %v40 = vld [vmem:[%s1 + $0xc] sm:$0xf]
  %v41 = vld [vmem:[%s1 + $0x10] sm:$0xf]
  %v42 = vld [vmem:[%s1 + $0x14] sm:$0xf]
  %v43 = vld [vmem:[%s1 + $0x18] sm:$0xf]
  %v44 = vld [vmem:[%s1 + $0x1c] sm:$0xf]
  %v45 = vld [vmem:[%s1 + $0x20] sm:$0xf]
  %v46 = vld [vmem:[%s1 + $0x24] sm:$0xf]
  %v47 = vld [vmem:[%s1 + $0x28] sm:$0xf]
  %v48 = vld [vmem:[%s1 + $0x2c] sm:$0xf]
  %v49 = vld [vmem:[%s1 + $0x30] sm:$0xf]
  %v50 = vld [vmem:[%s1 + $0x34] sm:$0xf]
  %v51 = vld [vmem:[%s1 + $0x38] sm:$0xf]
  %v52 = vld [vmem:[%s1 + $0x3c] sm:$0xf]
  %v69 = vunpack.c.l.b16 %v21
  %v70 = vunpack.c.l.b16 %v22
  %v71 = vunpack.c.l.b16 %v23
  %v72 = vunpack.c.l.b16 %v24
  %v73 = vunpack.c.l.b16 %v25
  %v74 = vunpack.c.l.b16 %v26
  %v75 = vunpack.c.l.b16 %v27
  %v76 = vunpack.c.l.b16 %v28
  %v77 = vunpack.c.l.b16 %v29
  %v78 = vunpack.c.l.b16 %v30
  %v79 = vunpack.c.l.b16 %v31
  %v80 = vunpack.c.l.b16 %v32
  %v81 = vunpack.c.l.b16 %v33
  %v82 = vunpack.c.l.b16 %v34
  %v83 = vunpack.c.l.b16 %v35
  %v84 = vunpack.c.l.b16 %v36
  %v85 = vpack.c.b16 %v70, %v69
  %v86 = vpack.c.b16 %v72, %v71
  %v87 = vpack.c.b16 %v74, %v73
  %v88 = vpack.c.b16 %v76, %v75
  %v89 = vpack.c.b16 %v78, %v77
  %v90 = vpack.c.b16 %v80, %v79
  %v91 = vpack.c.b16 %v82, %v81
  %v92 = vpack.c.b16 %v84, %v83
  %v117 = vunpack.c.l.b16 %v37
  %v118 = vunpack.c.l.b16 %v38
  %v119 = vunpack.c.l.b16 %v39
  %v120 = vunpack.c.l.b16 %v40
  %v121 = vunpack.c.l.b16 %v41
  %v122 = vunpack.c.l.b16 %v42
  %v123 = vunpack.c.l.b16 %v43
  %v124 = vunpack.c.l.b16 %v44
  %v125 = vunpack.c.l.b16 %v45
  %v126 = vunpack.c.l.b16 %v46
  %v127 = vunpack.c.l.b16 %v47
  %v128 = vunpack.c.l.b16 %v48
  %v129 = vunpack.c.l.b16 %v49
  %v130 = vunpack.c.l.b16 %v50
  %v131 = vunpack.c.l.b16 %v51
  %v132 = vunpack.c.l.b16 %v52
  %v133 = vpack.c.b16 %v118, %v117
  %v134 = vpack.c.b16 %v120, %v119
  %v135 = vpack.c.b16 %v122, %v121
  %v136 = vpack.c.b16 %v124, %v123
  %v137 = vpack.c.b16 %v126, %v125
  %v138 = vpack.c.b16 %v128, %v127
  %v139 = vpack.c.b16 %v130, %v129
  %v140 = vpack.c.b16 %v132, %v131
  %149 = vmatprep.subr.bf16.mxu0 0
  %150 = vmatpush1.bf16.msra.mxu0 %v140
  %151 = vmatprep.subr.bf16.mxu0 0
  %152 = vmatpush1.bf16.msra.mxu0 %v139
  %153 = vmatprep.subr.bf16.mxu0 0
  %154 = vmatpush1.bf16.msra.mxu0 %v138
  %155 = vmatprep.subr.bf16.mxu0 0
  %156 = vmatpush1.bf16.msra.mxu0 %v137
  %157 = vmatprep.subr.bf16.mxu0 0
  %158 = vmatpush1.bf16.msra.mxu0 %v136
  %159 = vmatprep.subr.bf16.mxu0 0
  %160 = vmatpush1.bf16.msra.mxu0 %v135
  %161 = vmatprep.subr.bf16.mxu0 0
  %162 = vmatpush1.bf16.msra.mxu0 %v134
  %163 = vmatprep.subr.bf16.mxu0 0
  %164 = vmatpush1.bf16.msra.mxu0 %v133
  %165 = vmatprep.subr.bf16.mxu0 0
  %166 = vmatpush2.bf16.msra.mxu0 0
  %167 = vmatprep.subr.bf16.mxu0 0
  %168 = vmatpush2.bf16.msra.mxu0 0
  %169 = vmatprep.subr.bf16.mxu0 0
  %170 = vmatpush2.bf16.msra.mxu0 0
  %171 = vmatprep.subr.bf16.mxu0 0
  %172 = vmatpush2.bf16.msra.mxu0 0
  %173 = vmatprep.subr.bf16.mxu0 0
  %174 = vmatpush2.bf16.msra.mxu0 0
  %175 = vmatprep.subr.bf16.mxu0 0
  %176 = vmatpush2.bf16.msra.mxu0 0
  %177 = vmatprep.subr.bf16.mxu0 0
  %178 = vmatpush2.bf16.msra.mxu0 0
  %179 = vmatprep.subr.bf16.mxu0 0
  %180 = vmatpush2.bf16.msra.mxu0 0
  %181 = vmatprep.mubr.bf16.mxu0 0
  %182 = vmatmul.mubr.bf16.gmra.mxu0 %v85
  %v183 = vpop.f32.mrf.mxu0
  %v184 = vadd.f32 0.0, %v183
  %v185 = vpop.f32.mrf.mxu0
  %v186 = vpop.f32.mrf.mxu0
  %v187 = vadd.f32 0.0, %v186
  %v188 = vpop.f32.mrf.mxu0
  %189 = vmatprep.mubr.bf16.mxu0 0
  %190 = vmatmul.mubr.bf16.gmra.mxu0 %v86
  %v191 = vpop.f32.mrf.mxu0
  %v192 = vadd.f32 0.0, %v191
  %v193 = vpop.f32.mrf.mxu0
  %v194 = vpop.f32.mrf.mxu0
  %v195 = vadd.f32 0.0, %v194
  %v196 = vpop.f32.mrf.mxu0
  %197 = vmatprep.mubr.bf16.mxu0 0
  %198 = vmatmul.mubr.bf16.gmra.mxu0 %v87
  %v199 = vpop.f32.mrf.mxu0
  %v200 = vadd.f32 0.0, %v199
  %v201 = vpop.f32.mrf.mxu0
  %v202 = vpop.f32.mrf.mxu0
  %v203 = vadd.f32 0.0, %v202
  %v204 = vpop.f32.mrf.mxu0
  %205 = vmatprep.mubr.bf16.mxu0 0
  %206 = vmatmul.mubr.bf16.gmra.mxu0 %v88
  %v207 = vpop.f32.mrf.mxu0
  %v208 = vadd.f32 0.0, %v207
  %v209 = vpop.f32.mrf.mxu0
  %v210 = vpop.f32.mrf.mxu0
  %v211 = vadd.f32 0.0, %v210
  %v212 = vpop.f32.mrf.mxu0
  %213 = vmatprep.mubr.bf16.mxu0 0
  %214 = vmatmul.mubr.bf16.gmra.mxu0 %v89
  %v215 = vpop.f32.mrf.mxu0
  %v216 = vadd.f32 0.0, %v215
  %v217 = vpop.f32.mrf.mxu0
  %v218 = vpop.f32.mrf.mxu0
  %v219 = vadd.f32 0.0, %v218
  %v220 = vpop.f32.mrf.mxu0
  %221 = vmatprep.mubr.bf16.mxu0 0
  %222 = vmatmul.mubr.bf16.gmra.mxu0 %v90
  %v223 = vpop.f32.mrf.mxu0
  %v224 = vadd.f32 0.0, %v223
  %v225 = vpop.f32.mrf.mxu0
  %v226 = vpop.f32.mrf.mxu0
  %v227 = vadd.f32 0.0, %v226
  %v228 = vpop.f32.mrf.mxu0
  %229 = vmatprep.mubr.bf16.mxu0 0
  %230 = vmatmul.mubr.bf16.gmra.mxu0 %v91
  %v231 = vpop.f32.mrf.mxu0
  %v232 = vadd.f32 0.0, %v231
  %v233 = vpop.f32.mrf.mxu0
  %v234 = vpop.f32.mrf.mxu0
  %v235 = vadd.f32 0.0, %v234
  %v236 = vpop.f32.mrf.mxu0
  %237 = vmatprep.mubr.bf16.mxu0 0
  %238 = vmatmul.mubr.bf16.gmra.mxu0 %v92
  %v239 = vpop.f32.mrf.mxu0
  %v240 = vadd.f32 0.0, %v239
  %v241 = vpop.f32.mrf.mxu0
  %v242 = vpop.f32.mrf.mxu0
  %v243 = vadd.f32 0.0, %v242
  %v244 = vpop.f32.mrf.mxu0
  %245 = vdwg.mxu0
  %v246 = vld [vmem:[%s3] sm:$0x1]
  %v247 = vadd.f32 %v184, %v187
  %v248 = vadd.f32 %v247, %v192
  %v249 = vadd.f32 %v248, %v195
  %v250 = vadd.f32 %v249, %v200
  %v251 = vadd.f32 %v250, %v203
  %v252 = vadd.f32 %v251, %v208
  %v253 = vadd.f32 %v252, %v211
  %v254 = vadd.f32 %v253, %v216
  %v255 = vadd.f32 %v254, %v219
  %v256 = vadd.f32 %v255, %v224
  %v257 = vadd.f32 %v256, %v227
  %v258 = vadd.f32 %v257, %v232
  %v259 = vadd.f32 %v258, %v235
  %v260 = vadd.f32 %v259, %v240
  %v261 = vadd.f32 %v260, %v243
  %v262 = vrot.slane %v261, 4
  %v263 = vadd.f32 %v261, %v262
  %v264 = vrot.slane %v263, 2
  %v265 = vadd.f32 %v263, %v264
  %v266 = vrot.slane %v265, 1
  %v267 = vadd.f32 %v265, %v266
  %v268 = vadd.f32 %v246, %v267
  %269 = vst [vmem:[%s3] sm:$0x1] %v268
  %v270 = vld [vmem:[%s4] sm:$0x1]
  %v271 = vmul.f32 %v184, %v184
  %v272 = vmul.f32 %v187, %v187
  %v273 = vmul.f32 %v192, %v192
  %v274 = vmul.f32 %v195, %v195
  %v275 = vmul.f32 %v200, %v200
  %v276 = vmul.f32 %v203, %v203
  %v277 = vmul.f32 %v208, %v208
  %v278 = vmul.f32 %v211, %v211
  %v279 = vmul.f32 %v216, %v216
  %v280 = vmul.f32 %v219, %v219
  %v281 = vmul.f32 %v224, %v224
  %v282 = vmul.f32 %v227, %v227
  %v283 = vmul.f32 %v232, %v232
  %v284 = vmul.f32 %v235, %v235
  %v285 = vmul.f32 %v240, %v240
  %v286 = vmul.f32 %v243, %v243
  %v287 = vadd.f32 %v271, %v272
  %v288 = vadd.f32 %v287, %v273
  %v289 = vadd.f32 %v288, %v274
  %v290 = vadd.f32 %v289, %v275
  %v291 = vadd.f32 %v290, %v276
  %v292 = vadd.f32 %v291, %v277
  %v293 = vadd.f32 %v292, %v278
  %v294 = vadd.f32 %v293, %v279
  %v295 = vadd.f32 %v294, %v280
  %v296 = vadd.f32 %v295, %v281
  %v297 = vadd.f32 %v296, %v282
  %v298 = vadd.f32 %v297, %v283
  %v299 = vadd.f32 %v298, %v284
  %v300 = vadd.f32 %v299, %v285
  %v301 = vadd.f32 %v300, %v286
  %v302 = vrot.slane %v301, 4
  %v303 = vadd.f32 %v301, %v302
  %v304 = vrot.slane %v303, 2
  %v305 = vadd.f32 %v303, %v304
  %v306 = vrot.slane %v305, 1
  %v307 = vadd.f32 %v305, %v306
  %v308 = vadd.f32 %v270, %v307
  %309 = vst [vmem:[%s4] sm:$0x1] %v308
  %v310 = vpack.c.bf16 %v187, %v184
  %v311 = vpack.c.bf16 %v195, %v192
  %v312 = vpack.c.bf16 %v203, %v200
  %v313 = vpack.c.bf16 %v211, %v208
  %v314 = vpack.c.bf16 %v219, %v216
  %v315 = vpack.c.bf16 %v227, %v224
  %v316 = vpack.c.bf16 %v235, %v232
  %v317 = vpack.c.bf16 %v243, %v240
  %v326 = vunpack.c.l.b16 %v310
  %v327 = vunpack.c.h.b16 %v310
  %v328 = vunpack.c.l.b16 %v311
  %v329 = vunpack.c.h.b16 %v311
  %v330 = vunpack.c.l.b16 %v312
  %v331 = vunpack.c.h.b16 %v312
  %v332 = vunpack.c.l.b16 %v313
  %v333 = vunpack.c.h.b16 %v313
  %v334 = vunpack.c.l.b16 %v314
  %v335 = vunpack.c.h.b16 %v314
  %v336 = vunpack.c.l.b16 %v315
  %v337 = vunpack.c.h.b16 %v315
  %v338 = vunpack.c.l.b16 %v316
  %v339 = vunpack.c.h.b16 %v316
  %v340 = vunpack.c.l.b16 %v317
  %v341 = vunpack.c.h.b16 %v317
  %v342 = vpack.c.b16 %v326, %v326
  %v343 = vpack.c.b16 %v327, %v327
  %v344 = vpack.c.b16 %v328, %v328
  %v345 = vpack.c.b16 %v329, %v329
  %v346 = vpack.c.b16 %v330, %v330
  %v347 = vpack.c.b16 %v331, %v331
  %v348 = vpack.c.b16 %v332, %v332
  %v349 = vpack.c.b16 %v333, %v333
  %v350 = vpack.c.b16 %v334, %v334
  %v351 = vpack.c.b16 %v335, %v335
  %v352 = vpack.c.b16 %v336, %v336
  %v353 = vpack.c.b16 %v337, %v337
  %v354 = vpack.c.b16 %v338, %v338
  %v355 = vpack.c.b16 %v339, %v339
  %v356 = vpack.c.b16 %v340, %v340
  %v357 = vpack.c.b16 %v341, %v341
  %374 = vst [vmem:[%s2] sm:$0xf] %v342
  %375 = vst [vmem:[%s2 + $0x4] sm:$0xf] %v343
  %376 = vst [vmem:[%s2 + $0x8] sm:$0xf] %v344
  %377 = vst [vmem:[%s2 + $0xc] sm:$0xf] %v345
  %378 = vst [vmem:[%s2 + $0x10] sm:$0xf] %v346
  %379 = vst [vmem:[%s2 + $0x14] sm:$0xf] %v347
  %380 = vst [vmem:[%s2 + $0x18] sm:$0xf] %v348
  %381 = vst [vmem:[%s2 + $0x1c] sm:$0xf] %v349
  %382 = vst [vmem:[%s2 + $0x20] sm:$0xf] %v350
  %383 = vst [vmem:[%s2 + $0x24] sm:$0xf] %v351
  %384 = vst [vmem:[%s2 + $0x28] sm:$0xf] %v352
  %385 = vst [vmem:[%s2 + $0x2c] sm:$0xf] %v353
  %386 = vst [vmem:[%s2 + $0x30] sm:$0xf] %v354
  %387 = vst [vmem:[%s2 + $0x34] sm:$0xf] %v355
  %388 = vst [vmem:[%s2 + $0x38] sm:$0xf] %v356
  %389 = vst [vmem:[%s2 + $0x3c] sm:$0xf] %v357
  // Predicated region
  $region14: #{basic_block_forward.5} parent=0 // pred_check
    _
  $region15: #{basic_block_forward.5} parent=0 // pred_check_branch
    %391 = sbr.rel (0) target = $region17
  $region16: #{basic_block_forward.5} parent=0 // pred_region
    _
  $region17: #{basic_block_forward.5} parent=0 // pred_fallthru
    _
  // Predicated region
  $region18: #{basic_block_forward.5} parent=0 // pred_check
    _
  $region19: #{basic_block_forward.5} parent=0 // pred_check_branch
    %393 = sbr.rel (0) target = $region21
  $region20: #{basic_block_forward.5} parent=0 // pred_region
    _
  $region21: #{basic_block_forward.5} parent=0 // pred_fallthru
    _
  // Predicated region
  $region22: #{basic_block_forward.5} parent=0 // pred_check
    _
  $region23: #{basic_block_forward.5} parent=0 // pred_check_branch
    %395 = sbr.rel (0) target = $region25
  $region24: #{basic_block_forward.5} parent=0 // pred_region
    _
  $region25: #{basic_block_forward.5} parent=0 // pred_fallthru
    _
  // Predicated region
  $region26: #{basic_block_forward.5} parent=0 // pred_check
    _
  $region27: #{basic_block_forward.5} parent=0 // pred_check_branch
    %397 = sbr.rel (0) target = $region29
  $region28: #{basic_block_forward.5} parent=0 // pred_region
    _
  $region29: #{basic_block_forward.5} parent=0 // pred_fallthru
    _
  // Predicated region
  $region30: #{basic_block_forward.5} parent=0 // pred_check
    _
  $region31: #{basic_block_forward.5} parent=0 // pred_check_branch
    %399 = sbr.rel (0) target = $region33
  $region32: #{basic_block_forward.5} parent=0 // pred_region
    _
  $region33: #{basic_block_forward.5} parent=0 // pred_fallthru
    _
  // Predicated region
  $region34: #{basic_block_forward.5} parent=0 // pred_check
    _
  $region35: #{basic_block_forward.5} parent=0 // pred_check_branch
    %401 = sbr.rel (0) target = $region37
  $region36: #{basic_block_forward.5} parent=0 // pred_region
    _
  $region37: #{basic_block_forward.5} parent=0 // pred_fallthru
    _

// kernel: basic_block_forward.8
$region0: #{basic_block_forward.8}
  #allocation0 [shape = 'u32[]', space=smem, size = 0x4, offset = 0x4, fixed_abs, tag = 'smem constant byte address 0x4 - core index']
  #allocation1 [shape = 'u32[144,128]{1,0:T(1,128)}', space=vmem, size = 0x12000, scoped, tag = 'internal scratch']
  %s0 = inlined_call_operand.vmem [shape: bf16[128,128], index: 0, kind: input, shape index: {}]
  %s1 = inlined_call_operand.vmem [shape: bf16[128,128], index: 1, kind: input, shape index: {}]
  %s2 = inlined_call_operand.vmem [shape: f32[1,128], index: 2, kind: output, shape index: {0}]
  %s3 = inlined_call_operand.vmem [shape: f32[1,128], index: 3, kind: output, shape index: {1}]
  %4 = xla_tuple %s2, %s3
  %s5 = sld [smem:[#allocation0]]
  $region30: #{basic_block_forward.8} parent=0
    _
  %s7 = ssub.s32 1, %s5
  %s8 = scalar_select 0, %s7, %s5
  // Predicated region
  $region2: #{basic_block_forward.8} parent=0 // pred_check
    _
  $region3: #{basic_block_forward.8} parent=0 // pred_check_branch
    %10 = sbr.rel (0) target = $region5
  $region4: #{basic_block_forward.8} parent=0 // pred_region
    _
  $region5: #{basic_block_forward.8} parent=0 // pred_fallthru
    _
  // Predicated region
  $region6: #{basic_block_forward.8} parent=0 // pred_check
    _
  $region7: #{basic_block_forward.8} parent=0 // pred_check_branch
    %12 = sbr.rel (0) target = $region9
  $region8: #{basic_block_forward.8} parent=0 // pred_region
    _
  $region9: #{basic_block_forward.8} parent=0 // pred_fallthru
    _
  %p14 = scmp.eq.s32.totalorder 0, 0
  // Predicated region
  $region10: #{basic_block_forward.8} parent=0 // pred_check
    %p15 = pneg %p14
  $region11: #{basic_block_forward.8} parent=0 // pred_check_branch
    %17 = sbr.rel (%p15) target = $region13
  $region12: #{basic_block_forward.8} parent=0 // pred_region
    %18 = vst [vmem:[%s2] sm:$0x1] 0.0
    %19 = vst [vmem:[%s3] sm:$0x1] 0.0
  $region13: #{basic_block_forward.8} parent=0 // pred_fallthru
    _
  %v20 = vld [vmem:[%s0] sm:$0xf]
  %v21 = vld [vmem:[%s0 + $0x4] sm:$0xf]
  %v22 = vld [vmem:[%s0 + $0x8] sm:$0xf]
  %v23 = vld [vmem:[%s0 + $0xc] sm:$0xf]
  %v24 = vld [vmem:[%s0 + $0x10] sm:$0xf]
  %v25 = vld [vmem:[%s0 + $0x14] sm:$0xf]
  %v26 = vld [vmem:[%s0 + $0x18] sm:$0xf]
  %v27 = vld [vmem:[%s0 + $0x1c] sm:$0xf]
  %v28 = vld [vmem:[%s0 + $0x20] sm:$0xf]
  %v29 = vld [vmem:[%s0 + $0x24] sm:$0xf]
  %v30 = vld [vmem:[%s0 + $0x28] sm:$0xf]
  %v31 = vld [vmem:[%s0 + $0x2c] sm:$0xf]
  %v32 = vld [vmem:[%s0 + $0x30] sm:$0xf]
  %v33 = vld [vmem:[%s0 + $0x34] sm:$0xf]
  %v34 = vld [vmem:[%s0 + $0x38] sm:$0xf]
  %v35 = vld [vmem:[%s0 + $0x3c] sm:$0xf]
  %v36 = vld [vmem:[%s1] sm:$0xf]
  %v37 = vld [vmem:[%s1 + $0x4] sm:$0xf]
  %v38 = vld [vmem:[%s1 + $0x8] sm:$0xf]
  %v39 = vld [vmem:[%s1 + $0xc] sm:$0xf]
  %v40 = vld [vmem:[%s1 + $0x10] sm:$0xf]
  %v41 = vld [vmem:[%s1 + $0x14] sm:$0xf]
  %v42 = vld [vmem:[%s1 + $0x18] sm:$0xf]
  %v43 = vld [vmem:[%s1 + $0x1c] sm:$0xf]
  %v44 = vld [vmem:[%s1 + $0x20] sm:$0xf]
  %v45 = vld [vmem:[%s1 + $0x24] sm:$0xf]
  %v46 = vld [vmem:[%s1 + $0x28] sm:$0xf]
  %v47 = vld [vmem:[%s1 + $0x2c] sm:$0xf]
  %v48 = vld [vmem:[%s1 + $0x30] sm:$0xf]
  %v49 = vld [vmem:[%s1 + $0x34] sm:$0xf]
  %v50 = vld [vmem:[%s1 + $0x38] sm:$0xf]
  %v51 = vld [vmem:[%s1 + $0x3c] sm:$0xf]
  %v68 = vunpack.c.l.b16 %v20
  %v69 = vunpack.c.l.b16 %v21
  %v70 = vunpack.c.l.b16 %v22
  %v71 = vunpack.c.l.b16 %v23
  %v72 = vunpack.c.l.b16 %v24
  %v73 = vunpack.c.l.b16 %v25
  %v74 = vunpack.c.l.b16 %v26
  %v75 = vunpack.c.l.b16 %v27
  %v76 = vunpack.c.l.b16 %v28
  %v77 = vunpack.c.l.b16 %v29
  %v78 = vunpack.c.l.b16 %v30
  %v79 = vunpack.c.l.b16 %v31
  %v80 = vunpack.c.l.b16 %v32
  %v81 = vunpack.c.l.b16 %v33
  %v82 = vunpack.c.l.b16 %v34
  %v83 = vunpack.c.l.b16 %v35
  %v84 = vpack.c.b16 %v69, %v68
  %v85 = vpack.c.b16 %v71, %v70
  %v86 = vpack.c.b16 %v73, %v72
  %v87 = vpack.c.b16 %v75, %v74
  %v88 = vpack.c.b16 %v77, %v76
  %v89 = vpack.c.b16 %v79, %v78
  %v90 = vpack.c.b16 %v81, %v80
  %v91 = vpack.c.b16 %v83, %v82
  %v116 = vunpack.c.l.b16 %v36
  %v117 = vunpack.c.l.b16 %v37
  %v118 = vunpack.c.l.b16 %v38
  %v119 = vunpack.c.l.b16 %v39
  %v120 = vunpack.c.l.b16 %v40
  %v121 = vunpack.c.l.b16 %v41
  %v122 = vunpack.c.l.b16 %v42
  %v123 = vunpack.c.l.b16 %v43
  %v124 = vunpack.c.l.b16 %v44
  %v125 = vunpack.c.l.b16 %v45
  %v126 = vunpack.c.l.b16 %v46
  %v127 = vunpack.c.l.b16 %v47
  %v128 = vunpack.c.l.b16 %v48
  %v129 = vunpack.c.l.b16 %v49
  %v130 = vunpack.c.l.b16 %v50
  %v131 = vunpack.c.l.b16 %v51
  %v132 = vpack.c.b16 %v117, %v116
  %v133 = vpack.c.b16 %v119, %v118
  %v134 = vpack.c.b16 %v121, %v120
  %v135 = vpack.c.b16 %v123, %v122
  %v136 = vpack.c.b16 %v125, %v124
  %v137 = vpack.c.b16 %v127, %v126
  %v138 = vpack.c.b16 %v129, %v128
  %v139 = vpack.c.b16 %v131, %v130
  %148 = vmatprep.subr.bf16.mxu0 0
  %149 = vmatpush1.bf16.msra.mxu0 %v139
  %150 = vmatprep.subr.bf16.mxu0 0
  %151 = vmatpush1.bf16.msra.mxu0 %v138
  %152 = vmatprep.subr.bf16.mxu0 0
  %153 = vmatpush1.bf16.msra.mxu0 %v137
  %154 = vmatprep.subr.bf16.mxu0 0
  %155 = vmatpush1.bf16.msra.mxu0 %v136
  %156 = vmatprep.subr.bf16.mxu0 0
  %157 = vmatpush1.bf16.msra.mxu0 %v135
  %158 = vmatprep.subr.bf16.mxu0 0
  %159 = vmatpush1.bf16.msra.mxu0 %v134
  %160 = vmatprep.subr.bf16.mxu0 0
  %161 = vmatpush1.bf16.msra.mxu0 %v133
  %162 = vmatprep.subr.bf16.mxu0 0
  %163 = vmatpush1.bf16.msra.mxu0 %v132
  %164 = vmatprep.subr.bf16.mxu0 0
  %165 = vmatpush2.bf16.msra.mxu0 0
  %166 = vmatprep.subr.bf16.mxu0 0
  %167 = vmatpush2.bf16.msra.mxu0 0
  %168 = vmatprep.subr.bf16.mxu0 0
  %169 = vmatpush2.bf16.msra.mxu0 0
  %170 = vmatprep.subr.bf16.mxu0 0
  %171 = vmatpush2.bf16.msra.mxu0 0
  %172 = vmatprep.subr.bf16.mxu0 0
  %173 = vmatpush2.bf16.msra.mxu0 0
  %174 = vmatprep.subr.bf16.mxu0 0
  %175 = vmatpush2.bf16.msra.mxu0 0
  %176 = vmatprep.subr.bf16.mxu0 0
  %177 = vmatpush2.bf16.msra.mxu0 0
  %178 = vmatprep.subr.bf16.mxu0 0
  %179 = vmatpush2.bf16.msra.mxu0 0
  %180 = vmatprep.mubr.bf16.mxu0 0
  %181 = vmatmul.mubr.bf16.gmra.mxu0 %v84
  %v182 = vpop.f32.mrf.mxu0
  %v183 = vadd.f32 0.0, %v182
  %v184 = vpop.f32.mrf.mxu0
  %v185 = vpop.f32.mrf.mxu0
  %v186 = vadd.f32 0.0, %v185
  %v187 = vpop.f32.mrf.mxu0
  %188 = vmatprep.mubr.bf16.mxu0 0
  %189 = vmatmul.mubr.bf16.gmra.mxu0 %v85
  %v190 = vpop.f32.mrf.mxu0
  %v191 = vadd.f32 0.0, %v190
  %v192 = vpop.f32.mrf.mxu0
  %v193 = vpop.f32.mrf.mxu0
  %v194 = vadd.f32 0.0, %v193
  %v195 = vpop.f32.mrf.mxu0
  %196 = vmatprep.mubr.bf16.mxu0 0
  %197 = vmatmul.mubr.bf16.gmra.mxu0 %v86
  %v198 = vpop.f32.mrf.mxu0
  %v199 = vadd.f32 0.0, %v198
  %v200 = vpop.f32.mrf.mxu0
  %v201 = vpop.f32.mrf.mxu0
  %v202 = vadd.f32 0.0, %v201
  %v203 = vpop.f32.mrf.mxu0
  %204 = vmatprep.mubr.bf16.mxu0 0
  %205 = vmatmul.mubr.bf16.gmra.mxu0 %v87
  %v206 = vpop.f32.mrf.mxu0
  %v207 = vadd.f32 0.0, %v206
  %v208 = vpop.f32.mrf.mxu0
  %v209 = vpop.f32.mrf.mxu0
  %v210 = vadd.f32 0.0, %v209
  %v211 = vpop.f32.mrf.mxu0
  %212 = vmatprep.mubr.bf16.mxu0 0
  %213 = vmatmul.mubr.bf16.gmra.mxu0 %v88
  %v214 = vpop.f32.mrf.mxu0
  %v215 = vadd.f32 0.0, %v214
  %v216 = vpop.f32.mrf.mxu0
  %v217 = vpop.f32.mrf.mxu0
  %v218 = vadd.f32 0.0, %v217
  %v219 = vpop.f32.mrf.mxu0
  %220 = vmatprep.mubr.bf16.mxu0 0
  %221 = vmatmul.mubr.bf16.gmra.mxu0 %v89
  %v222 = vpop.f32.mrf.mxu0
  %v223 = vadd.f32 0.0, %v222
  %v224 = vpop.f32.mrf.mxu0
  %v225 = vpop.f32.mrf.mxu0
  %v226 = vadd.f32 0.0, %v225
  %v227 = vpop.f32.mrf.mxu0
  %228 = vmatprep.mubr.bf16.mxu0 0
  %229 = vmatmul.mubr.bf16.gmra.mxu0 %v90
  %v230 = vpop.f32.mrf.mxu0
  %v231 = vadd.f32 0.0, %v230
  %v232 = vpop.f32.mrf.mxu0
  %v233 = vpop.f32.mrf.mxu0
  %v234 = vadd.f32 0.0, %v233
  %v235 = vpop.f32.mrf.mxu0
  %236 = vmatprep.mubr.bf16.mxu0 0
  %237 = vmatmul.mubr.bf16.gmra.mxu0 %v91
  %v238 = vpop.f32.mrf.mxu0
  %v239 = vadd.f32 0.0, %v238
  %v240 = vpop.f32.mrf.mxu0
  %v241 = vpop.f32.mrf.mxu0
  %v242 = vadd.f32 0.0, %v241
  %v243 = vpop.f32.mrf.mxu0
  %244 = vdwg.mxu0
  %v245 = vld [vmem:[%s2] sm:$0x1]
  %v246 = vadd.f32 %v183, %v186
  %v247 = vadd.f32 %v246, %v191
  %v248 = vadd.f32 %v247, %v194
  %v249 = vadd.f32 %v248, %v199
  %v250 = vadd.f32 %v249, %v202
  %v251 = vadd.f32 %v250, %v207
  %v252 = vadd.f32 %v251, %v210
  %v253 = vadd.f32 %v252, %v215
  %v254 = vadd.f32 %v253, %v218
  %v255 = vadd.f32 %v254, %v223
  %v256 = vadd.f32 %v255, %v226
  %v257 = vadd.f32 %v256, %v231
  %v258 = vadd.f32 %v257, %v234
  %v259 = vadd.f32 %v258, %v239
  %v260 = vadd.f32 %v259, %v242
  %v261 = vrot.slane %v260, 4
  %v262 = vadd.f32 %v260, %v261
  %v263 = vrot.slane %v262, 2
  %v264 = vadd.f32 %v262, %v263
  %v265 = vrot.slane %v264, 1
  %v266 = vadd.f32 %v264, %v265
  %v267 = vadd.f32 %v245, %v266
  %268 = vst [vmem:[%s2] sm:$0x1] %v267
  %v269 = vld [vmem:[%s3] sm:$0x1]
  %v270 = vmul.f32 %v183, %v183
  %v271 = vmul.f32 %v186, %v186
  %v272 = vmul.f32 %v191, %v191
  %v273 = vmul.f32 %v194, %v194
  %v274 = vmul.f32 %v199, %v199
  %v275 = vmul.f32 %v202, %v202
  %v276 = vmul.f32 %v207, %v207
  %v277 = vmul.f32 %v210, %v210
  %v278 = vmul.f32 %v215, %v215
  %v279 = vmul.f32 %v218, %v218
  %v280 = vmul.f32 %v223, %v223
  %v281 = vmul.f32 %v226, %v226
  %v282 = vmul.f32 %v231, %v231
  %v283 = vmul.f32 %v234, %v234
  %v284 = vmul.f32 %v239, %v239
  %v285 = vmul.f32 %v242, %v242
  %v286 = vadd.f32 %v270, %v271
  %v287 = vadd.f32 %v286, %v272
  %v288 = vadd.f32 %v287, %v273
  %v289 = vadd.f32 %v288, %v274
  %v290 = vadd.f32 %v289, %v275
  %v291 = vadd.f32 %v290, %v276
  %v292 = vadd.f32 %v291, %v277
  %v293 = vadd.f32 %v292, %v278
  %v294 = vadd.f32 %v293, %v279
  %v295 = vadd.f32 %v294, %v280
  %v296 = vadd.f32 %v295, %v281
  %v297 = vadd.f32 %v296, %v282
  %v298 = vadd.f32 %v297, %v283
  %v299 = vadd.f32 %v298, %v284
  %v300 = vadd.f32 %v299, %v285
  %v301 = vrot.slane %v300, 4
  %v302 = vadd.f32 %v300, %v301
  %v303 = vrot.slane %v302, 2
  %v304 = vadd.f32 %v302, %v303
  %v305 = vrot.slane %v304, 1
  %v306 = vadd.f32 %v304, %v305
  %v307 = vadd.f32 %v269, %v306
  %308 = vst [vmem:[%s3] sm:$0x1] %v307
  // Predicated region
  $region14: #{basic_block_forward.8} parent=0 // pred_check
    _
  $region15: #{basic_block_forward.8} parent=0 // pred_check_branch
    %310 = sbr.rel (0) target = $region17
  $region16: #{basic_block_forward.8} parent=0 // pred_region
    _
  $region17: #{basic_block_forward.8} parent=0 // pred_fallthru
    _
  // Predicated region
  $region18: #{basic_block_forward.8} parent=0 // pred_check
    _
  $region19: #{basic_block_forward.8} parent=0 // pred_check_branch
    %312 = sbr.rel (0) target = $region21
  $region20: #{basic_block_forward.8} parent=0 // pred_region
    _
  $region21: #{basic_block_forward.8} parent=0 // pred_fallthru
    _
  // Predicated region
  $region22: #{basic_block_forward.8} parent=0 // pred_check
    _
  $region23: #{basic_block_forward.8} parent=0 // pred_check_branch
    %314 = sbr.rel (0) target = $region25
  $region24: #{basic_block_forward.8} parent=0 // pred_region
    _
  $region25: #{basic_block_forward.8} parent=0 // pred_fallthru
    _
  // Predicated region
  $region26: #{basic_block_forward.8} parent=0 // pred_check
    _
  $region27: #{basic_block_forward.8} parent=0 // pred_check_branch
    %316 = sbr.rel (0) target = $region29
  $region28: #{basic_block_forward.8} parent=0 // pred_region
    _
  $region29: #{basic_block_forward.8} parent=0 // pred_fallthru
    _

// kernel: basic_block_forward.9
$region0: #{basic_block_forward.9}
  #allocation0 [shape = 'u32[]', space=smem, size = 0x4, offset = 0x4, fixed_abs, tag = 'smem constant byte address 0x4 - core index']
  #allocation1 [shape = 'u32[144,128]{1,0:T(1,128)}', space=vmem, size = 0x12000, scoped, tag = 'internal scratch']
  %s0 = inlined_call_operand.vmem [shape: bf16[128,128], index: 0, kind: input, shape index: {}]
  %s1 = inlined_call_operand.vmem [shape: bf16[128,128], index: 1, kind: input, shape index: {}]
  %s2 = inlined_call_operand.vmem [shape: bf16[128,128], index: 2, kind: input, shape index: {}]
  %s3 = inlined_call_operand.vmem [shape: f32[1,128], index: 3, kind: input, shape index: {}]
  %s4 = inlined_call_operand.vmem [shape: f32[1,128], index: 4, kind: input, shape index: {}]
  %s5 = inlined_call_operand.vmem [shape: f32[1,128], index: 5, kind: input, shape index: {}]
  %s6 = inlined_call_operand.vmem [shape: f32[1,128], index: 6, kind: input, shape index: {}]
  %s7 = inlined_call_operand.vmem [shape: f32[128,128], index: 7, kind: output, shape index: {}]
  %s8 = sld [smem:[#allocation0]]
  $region38: #{basic_block_forward.9} parent=0
    _
  %s10 = ssub.s32 1, %s8
  %s11 = scalar_select 0, %s10, %s8
  // Predicated region
  $region2: #{basic_block_forward.9} parent=0 // pred_check
    _
  $region3: #{basic_block_forward.9} parent=0 // pred_check_branch
    %13 = sbr.rel (0) target = $region5
  $region4: #{basic_block_forward.9} parent=0 // pred_region
    _
  $region5: #{basic_block_forward.9} parent=0 // pred_fallthru
    _
  // Predicated region
  $region6: #{basic_block_forward.9} parent=0 // pred_check
    _
  $region7: #{basic_block_forward.9} parent=0 // pred_check_branch
    %15 = sbr.rel (0) target = $region9
  $region8: #{basic_block_forward.9} parent=0 // pred_region
    _
  $region9: #{basic_block_forward.9} parent=0 // pred_fallthru
    _
  // Predicated region
  $region10: #{basic_block_forward.9} parent=0 // pred_check
    _
  $region11: #{basic_block_forward.9} parent=0 // pred_check_branch
    %17 = sbr.rel (0) target = $region13
  $region12: #{basic_block_forward.9} parent=0 // pred_region
    _
  $region13: #{basic_block_forward.9} parent=0 // pred_fallthru
    _
  // Predicated region
  $region14: #{basic_block_forward.9} parent=0 // pred_check
    _
  $region15: #{basic_block_forward.9} parent=0 // pred_check_branch
    %19 = sbr.rel (0) target = $region17
  $region16: #{basic_block_forward.9} parent=0 // pred_region
    _
  $region17: #{basic_block_forward.9} parent=0 // pred_fallthru
    _
  // Predicated region
  $region18: #{basic_block_forward.9} parent=0 // pred_check
    _
  $region19: #{basic_block_forward.9} parent=0 // pred_check_branch
    %21 = sbr.rel (0) target = $region21
  $region20: #{basic_block_forward.9} parent=0 // pred_region
    _
  $region21: #{basic_block_forward.9} parent=0 // pred_fallthru
    _
  // Predicated region
  $region22: #{basic_block_forward.9} parent=0 // pred_check
    _
  $region23: #{basic_block_forward.9} parent=0 // pred_check_branch
    %23 = sbr.rel (0) target = $region25
  $region24: #{basic_block_forward.9} parent=0 // pred_region
    _
  $region25: #{basic_block_forward.9} parent=0 // pred_fallthru
    _
  // Predicated region
  $region26: #{basic_block_forward.9} parent=0 // pred_check
    _
  $region27: #{basic_block_forward.9} parent=0 // pred_check_branch
    %25 = sbr.rel (0) target = $region29
  $region28: #{basic_block_forward.9} parent=0 // pred_region
    _
  $region29: #{basic_block_forward.9} parent=0 // pred_fallthru
    _
  %v27 = vld [vmem:[%s1] sm:$0xf]
  %v28 = vld [vmem:[%s1 + $0x4] sm:$0xf]
  %v29 = vld [vmem:[%s1 + $0x8] sm:$0xf]
  %v30 = vld [vmem:[%s1 + $0xc] sm:$0xf]
  %v31 = vld [vmem:[%s1 + $0x10] sm:$0xf]
  %v32 = vld [vmem:[%s1 + $0x14] sm:$0xf]
  %v33 = vld [vmem:[%s1 + $0x18] sm:$0xf]
  %v34 = vld [vmem:[%s1 + $0x1c] sm:$0xf]
  %v35 = vld [vmem:[%s1 + $0x20] sm:$0xf]
  %v36 = vld [vmem:[%s1 + $0x24] sm:$0xf]
  %v37 = vld [vmem:[%s1 + $0x28] sm:$0xf]
  %v38 = vld [vmem:[%s1 + $0x2c] sm:$0xf]
  %v39 = vld [vmem:[%s1 + $0x30] sm:$0xf]
  %v40 = vld [vmem:[%s1 + $0x34] sm:$0xf]
  %v41 = vld [vmem:[%s1 + $0x38] sm:$0xf]
  %v42 = vld [vmem:[%s1 + $0x3c] sm:$0xf]
  %v43 = vld [vmem:[%s2] sm:$0xf]
  %v44 = vld [vmem:[%s2 + $0x4] sm:$0xf]
  %v45 = vld [vmem:[%s2 + $0x8] sm:$0xf]
  %v46 = vld [vmem:[%s2 + $0xc] sm:$0xf]
  %v47 = vld [vmem:[%s2 + $0x10] sm:$0xf]
  %v48 = vld [vmem:[%s2 + $0x14] sm:$0xf]
  %v49 = vld [vmem:[%s2 + $0x18] sm:$0xf]
  %v50 = vld [vmem:[%s2 + $0x1c] sm:$0xf]
  %v51 = vld [vmem:[%s2 + $0x20] sm:$0xf]
  %v52 = vld [vmem:[%s2 + $0x24] sm:$0xf]
  %v53 = vld [vmem:[%s2 + $0x28] sm:$0xf]
  %v54 = vld [vmem:[%s2 + $0x2c] sm:$0xf]
  %v55 = vld [vmem:[%s2 + $0x30] sm:$0xf]
  %v56 = vld [vmem:[%s2 + $0x34] sm:$0xf]
  %v57 = vld [vmem:[%s2 + $0x38] sm:$0xf]
  %v58 = vld [vmem:[%s2 + $0x3c] sm:$0xf]
  %v75 = vunpack.c.l.b16 %v27
  %v76 = vunpack.c.l.b16 %v28
  %v77 = vunpack.c.l.b16 %v29
  %v78 = vunpack.c.l.b16 %v30
  %v79 = vunpack.c.l.b16 %v31
  %v80 = vunpack.c.l.b16 %v32
  %v81 = vunpack.c.l.b16 %v33
  %v82 = vunpack.c.l.b16 %v34
  %v83 = vunpack.c.l.b16 %v35
  %v84 = vunpack.c.l.b16 %v36
  %v85 = vunpack.c.l.b16 %v37
  %v86 = vunpack.c.l.b16 %v38
  %v87 = vunpack.c.l.b16 %v39
  %v88 = vunpack.c.l.b16 %v40
  %v89 = vunpack.c.l.b16 %v41
  %v90 = vunpack.c.l.b16 %v42
  %v91 = vpack.c.b16 %v76, %v75
  %v92 = vpack.c.b16 %v78, %v77
  %v93 = vpack.c.b16 %v80, %v79
  %v94 = vpack.c.b16 %v82, %v81
  %v95 = vpack.c.b16 %v84, %v83
  %v96 = vpack.c.b16 %v86, %v85
  %v97 = vpack.c.b16 %v88, %v87
  %v98 = vpack.c.b16 %v90, %v89
  %v123 = vunpack.c.l.b16 %v43
  %v124 = vunpack.c.l.b16 %v44
  %v125 = vunpack.c.l.b16 %v45
  %v126 = vunpack.c.l.b16 %v46
  %v127 = vunpack.c.l.b16 %v47
  %v128 = vunpack.c.l.b16 %v48
  %v129 = vunpack.c.l.b16 %v49
  %v130 = vunpack.c.l.b16 %v50
  %v131 = vunpack.c.l.b16 %v51
  %v132 = vunpack.c.l.b16 %v52
  %v133 = vunpack.c.l.b16 %v53
  %v134 = vunpack.c.l.b16 %v54
  %v135 = vunpack.c.l.b16 %v55
  %v136 = vunpack.c.l.b16 %v56
  %v137 = vunpack.c.l.b16 %v57
  %v138 = vunpack.c.l.b16 %v58
  %v139 = vpack.c.b16 %v124, %v123
  %v140 = vpack.c.b16 %v126, %v125
  %v141 = vpack.c.b16 %v128, %v127
  %v142 = vpack.c.b16 %v130, %v129
  %v143 = vpack.c.b16 %v132, %v131
  %v144 = vpack.c.b16 %v134, %v133
  %v145 = vpack.c.b16 %v136, %v135
  %v146 = vpack.c.b16 %v138, %v137
  %155 = vmatprep.subr.bf16.mxu0 0
  %156 = vmatpush1.bf16.msra.mxu0 %v146
  %157 = vmatprep.subr.bf16.mxu0 0
  %158 = vmatpush1.bf16.msra.mxu0 %v145
  %159 = vmatprep.subr.bf16.mxu0 0
  %160 = vmatpush1.bf16.msra.mxu0 %v144
  %161 = vmatprep.subr.bf16.mxu0 0
  %162 = vmatpush1.bf16.msra.mxu0 %v143
  %163 = vmatprep.subr.bf16.mxu0 0
  %164 = vmatpush1.bf16.msra.mxu0 %v142
  %165 = vmatprep.subr.bf16.mxu0 0
  %166 = vmatpush1.bf16.msra.mxu0 %v141
  %167 = vmatprep.subr.bf16.mxu0 0
  %168 = vmatpush1.bf16.msra.mxu0 %v140
  %169 = vmatprep.subr.bf16.mxu0 0
  %170 = vmatpush1.bf16.msra.mxu0 %v139
  %171 = vmatprep.subr.bf16.mxu0 0
  %172 = vmatpush2.bf16.msra.mxu0 0
  %173 = vmatprep.subr.bf16.mxu0 0
  %174 = vmatpush2.bf16.msra.mxu0 0
  %175 = vmatprep.subr.bf16.mxu0 0
  %176 = vmatpush2.bf16.msra.mxu0 0
  %177 = vmatprep.subr.bf16.mxu0 0
  %178 = vmatpush2.bf16.msra.mxu0 0
  %179 = vmatprep.subr.bf16.mxu0 0
  %180 = vmatpush2.bf16.msra.mxu0 0
  %181 = vmatprep.subr.bf16.mxu0 0
  %182 = vmatpush2.bf16.msra.mxu0 0
  %183 = vmatprep.subr.bf16.mxu0 0
  %184 = vmatpush2.bf16.msra.mxu0 0
  %185 = vmatprep.subr.bf16.mxu0 0
  %186 = vmatpush2.bf16.msra.mxu0 0
  %187 = vmatprep.mubr.bf16.mxu0 0
  %188 = vmatmul.mubr.bf16.gmra.mxu0 %v91
  %v189 = vpop.f32.mrf.mxu0
  %v190 = vadd.f32 0.0, %v189
  %v191 = vpop.f32.mrf.mxu0
  %v192 = vpop.f32.mrf.mxu0
  %v193 = vadd.f32 0.0, %v192
  %v194 = vpop.f32.mrf.mxu0
  %195 = vmatprep.mubr.bf16.mxu0 0
  %196 = vmatmul.mubr.bf16.gmra.mxu0 %v92
  %v197 = vpop.f32.mrf.mxu0
  %v198 = vadd.f32 0.0, %v197
  %v199 = vpop.f32.mrf.mxu0
  %v200 = vpop.f32.mrf.mxu0
  %v201 = vadd.f32 0.0, %v200
  %v202 = vpop.f32.mrf.mxu0
  %203 = vmatprep.mubr.bf16.mxu0 0
  %204 = vmatmul.mubr.bf16.gmra.mxu0 %v93
  %v205 = vpop.f32.mrf.mxu0
  %v206 = vadd.f32 0.0, %v205
  %v207 = vpop.f32.mrf.mxu0
  %v208 = vpop.f32.mrf.mxu0
  %v209 = vadd.f32 0.0, %v208
  %v210 = vpop.f32.mrf.mxu0
  %211 = vmatprep.mubr.bf16.mxu0 0
  %212 = vmatmul.mubr.bf16.gmra.mxu0 %v94
  %v213 = vpop.f32.mrf.mxu0
  %v214 = vadd.f32 0.0, %v213
  %v215 = vpop.f32.mrf.mxu0
  %v216 = vpop.f32.mrf.mxu0
  %v217 = vadd.f32 0.0, %v216
  %v218 = vpop.f32.mrf.mxu0
  %219 = vmatprep.mubr.bf16.mxu0 0
  %220 = vmatmul.mubr.bf16.gmra.mxu0 %v95
  %v221 = vpop.f32.mrf.mxu0
  %v222 = vadd.f32 0.0, %v221
  %v223 = vpop.f32.mrf.mxu0
  %v224 = vpop.f32.mrf.mxu0
  %v225 = vadd.f32 0.0, %v224
  %v226 = vpop.f32.mrf.mxu0
  %227 = vmatprep.mubr.bf16.mxu0 0
  %228 = vmatmul.mubr.bf16.gmra.mxu0 %v96
  %v229 = vpop.f32.mrf.mxu0
  %v230 = vadd.f32 0.0, %v229
  %v231 = vpop.f32.mrf.mxu0
  %v232 = vpop.f32.mrf.mxu0
  %v233 = vadd.f32 0.0, %v232
  %v234 = vpop.f32.mrf.mxu0
  %235 = vmatprep.mubr.bf16.mxu0 0
  %236 = vmatmul.mubr.bf16.gmra.mxu0 %v97
  %v237 = vpop.f32.mrf.mxu0
  %v238 = vadd.f32 0.0, %v237
  %v239 = vpop.f32.mrf.mxu0
  %v240 = vpop.f32.mrf.mxu0
  %v241 = vadd.f32 0.0, %v240
  %v242 = vpop.f32.mrf.mxu0
  %243 = vmatprep.mubr.bf16.mxu0 0
  %244 = vmatmul.mubr.bf16.gmra.mxu0 %v98
  %v245 = vpop.f32.mrf.mxu0
  %v246 = vadd.f32 0.0, %v245
  %v247 = vpop.f32.mrf.mxu0
  %v248 = vpop.f32.mrf.mxu0
  %v249 = vadd.f32 0.0, %v248
  %v250 = vpop.f32.mrf.mxu0
  %251 = vdwg.mxu0
  %v252 = vld [vmem:[%s0] sm:$0xf]
  %v253 = vld [vmem:[%s0 + $0x4] sm:$0xf]
  %v254 = vld [vmem:[%s0 + $0x8] sm:$0xf]
  %v255 = vld [vmem:[%s0 + $0xc] sm:$0xf]
  %v256 = vld [vmem:[%s0 + $0x10] sm:$0xf]
  %v257 = vld [vmem:[%s0 + $0x14] sm:$0xf]
  %v258 = vld [vmem:[%s0 + $0x18] sm:$0xf]
  %v259 = vld [vmem:[%s0 + $0x1c] sm:$0xf]
  %v260 = vld [vmem:[%s0 + $0x20] sm:$0xf]
  %v261 = vld [vmem:[%s0 + $0x24] sm:$0xf]
  %v262 = vld [vmem:[%s0 + $0x28] sm:$0xf]
  %v263 = vld [vmem:[%s0 + $0x2c] sm:$0xf]
  %v264 = vld [vmem:[%s0 + $0x30] sm:$0xf]
  %v265 = vld [vmem:[%s0 + $0x34] sm:$0xf]
  %v266 = vld [vmem:[%s0 + $0x38] sm:$0xf]
  %v267 = vld [vmem:[%s0 + $0x3c] sm:$0xf]
  %v268 = vunpack.c.l.bf16 %v252
  %v269 = vunpack.c.l.bf16 %v253
  %v270 = vunpack.c.l.bf16 %v254
  %v271 = vunpack.c.l.bf16 %v255
  %v272 = vunpack.c.l.bf16 %v256
  %v273 = vunpack.c.l.bf16 %v257
  %v274 = vunpack.c.l.bf16 %v258
  %v275 = vunpack.c.l.bf16 %v259
  %v276 = vunpack.c.l.bf16 %v260
  %v277 = vunpack.c.l.bf16 %v261
  %v278 = vunpack.c.l.bf16 %v262
  %v279 = vunpack.c.l.bf16 %v263
  %v280 = vunpack.c.l.bf16 %v264
  %v281 = vunpack.c.l.bf16 %v265
  %v282 = vunpack.c.l.bf16 %v266
  %v283 = vunpack.c.l.bf16 %v267
  %v284 = vld [vmem:[%s3] sm:$0x1]
  %v286 = vlaneseq
  %v287 = vshrl.u32 %v286, 7
  %v288 = vsub.s32 0, %v287
  %v289 = vrot.slane %v284, %v288
  %v291 = vmul.f32 %v268, %v289
  %v292 = vmul.f32 %v269, %v289
  %v293 = vmul.f32 %v270, %v289
  %v294 = vmul.f32 %v271, %v289
  %v295 = vmul.f32 %v272, %v289
  %v296 = vmul.f32 %v273, %v289
  %v297 = vmul.f32 %v274, %v289
  %v298 = vmul.f32 %v275, %v289
  %v299 = vmul.f32 %v276, %v289
  %v300 = vmul.f32 %v277, %v289
  %v301 = vmul.f32 %v278, %v289
  %v302 = vmul.f32 %v279, %v289
  %v303 = vmul.f32 %v280, %v289
  %v304 = vmul.f32 %v281, %v289
  %v305 = vmul.f32 %v282, %v289
  %v306 = vmul.f32 %v283, %v289
  %v307 = vld [vmem:[%s4] sm:$0x1]
  %v309 = vlaneseq
  %v310 = vshrl.u32 %v309, 7
  %v311 = vsub.s32 0, %v310
  %v312 = vrot.slane %v307, %v311
  %v314 = vadd.f32 %v291, %v312
  %v315 = vadd.f32 %v292, %v312
  %v316 = vadd.f32 %v293, %v312
  %v317 = vadd.f32 %v294, %v312
  %v318 = vadd.f32 %v295, %v312
  %v319 = vadd.f32 %v296, %v312
  %v320 = vadd.f32 %v297, %v312
  %v321 = vadd.f32 %v298, %v312
  %v322 = vadd.f32 %v299, %v312
  %v323 = vadd.f32 %v300, %v312
  %v324 = vadd.f32 %v301, %v312
  %v325 = vadd.f32 %v302, %v312
  %v326 = vadd.f32 %v303, %v312
  %v327 = vadd.f32 %v304, %v312
  %v328 = vadd.f32 %v305, %v312
  %v329 = vadd.f32 %v306, %v312
  %v330 = vld [vmem:[%s5] sm:$0x1]
  %v332 = vlaneseq
  %v333 = vshrl.u32 %v332, 7
  %v334 = vsub.s32 0, %v333
  %v335 = vrot.slane %v330, %v334
  %v337 = vmul.f32 %v190, %v335
  %v338 = vmul.f32 %v193, %v335
  %v339 = vmul.f32 %v198, %v335
  %v340 = vmul.f32 %v201, %v335
  %v341 = vmul.f32 %v206, %v335
  %v342 = vmul.f32 %v209, %v335
  %v343 = vmul.f32 %v214, %v335
  %v344 = vmul.f32 %v217, %v335
  %v345 = vmul.f32 %v222, %v335
  %v346 = vmul.f32 %v225, %v335
  %v347 = vmul.f32 %v230, %v335
  %v348 = vmul.f32 %v233, %v335
  %v349 = vmul.f32 %v238, %v335
  %v350 = vmul.f32 %v241, %v335
  %v351 = vmul.f32 %v246, %v335
  %v352 = vmul.f32 %v249, %v335
  %v353 = vld [vmem:[%s6] sm:$0x1]
  %v355 = vlaneseq
  %v356 = vshrl.u32 %v355, 7
  %v357 = vsub.s32 0, %v356
  %v358 = vrot.slane %v353, %v357
  %v360 = vadd.f32 %v337, %v358
  %v361 = vadd.f32 %v338, %v358
  %v362 = vadd.f32 %v339, %v358
  %v363 = vadd.f32 %v340, %v358
  %v364 = vadd.f32 %v341, %v358
  %v365 = vadd.f32 %v342, %v358
  %v366 = vadd.f32 %v343, %v358
  %v367 = vadd.f32 %v344, %v358
  %v368 = vadd.f32 %v345, %v358
  %v369 = vadd.f32 %v346, %v358
  %v370 = vadd.f32 %v347, %v358
  %v371 = vadd.f32 %v348, %v358
  %v372 = vadd.f32 %v349, %v358
  %v373 = vadd.f32 %v350, %v358
  %v374 = vadd.f32 %v351, %v358
  %v375 = vadd.f32 %v352, %v358
  %v376 = vadd.f32 %v314, %v360
  %v377 = vadd.f32 %v315, %v361
  %v378 = vadd.f32 %v316, %v362
  %v379 = vadd.f32 %v317, %v363
  %v380 = vadd.f32 %v318, %v364
  %v381 = vadd.f32 %v319, %v365
  %v382 = vadd.f32 %v320, %v366
  %v383 = vadd.f32 %v321, %v367
  %v384 = vadd.f32 %v322, %v368
  %v385 = vadd.f32 %v323, %v369
  %v386 = vadd.f32 %v324, %v370
  %v387 = vadd.f32 %v325, %v371
  %v388 = vadd.f32 %v326, %v372
  %v389 = vadd.f32 %v327, %v373
  %v390 = vadd.f32 %v328, %v374
  %v391 = vadd.f32 %v329, %v375
  %v392 = vmax.f32 %v376, 0.0
  %v393 = vmax.f32 %v377, 0.0
  %v394 = vmax.f32 %v378, 0.0
  %v395 = vmax.f32 %v379, 0.0
  %v396 = vmax.f32 %v380, 0.0
  %v397 = vmax.f32 %v381, 0.0
  %v398 = vmax.f32 %v382, 0.0
  %v399 = vmax.f32 %v383, 0.0
  %v400 = vmax.f32 %v384, 0.0
  %v401 = vmax.f32 %v385, 0.0
  %v402 = vmax.f32 %v386, 0.0
  %v403 = vmax.f32 %v387, 0.0
  %v404 = vmax.f32 %v388, 0.0
  %v405 = vmax.f32 %v389, 0.0
  %v406 = vmax.f32 %v390, 0.0
  %v407 = vmax.f32 %v391, 0.0
  %408 = vst [vmem:[%s7] sm:$0xff] %v392
  %409 = vst [vmem:[%s7 + $0x8] sm:$0xff] %v393
  %410 = vst [vmem:[%s7 + $0x10] sm:$0xff] %v394
  %411 = vst [vmem:[%s7 + $0x18] sm:$0xff] %v395
  %412 = vst [vmem:[%s7 + $0x20] sm:$0xff] %v396
  %413 = vst [vmem:[%s7 + $0x28] sm:$0xff] %v397
  %414 = vst [vmem:[%s7 + $0x30] sm:$0xff] %v398
  %415 = vst [vmem:[%s7 + $0x38] sm:$0xff] %v399
  %416 = vst [vmem:[%s7 + $0x40] sm:$0xff] %v400
  %417 = vst [vmem:[%s7 + $0x48] sm:$0xff] %v401
  %418 = vst [vmem:[%s7 + $0x50] sm:$0xff] %v402
  %419 = vst [vmem:[%s7 + $0x58] sm:$0xff] %v403
  %420 = vst [vmem:[%s7 + $0x60] sm:$0xff] %v404
  %421 = vst [vmem:[%s7 + $0x68] sm:$0xff] %v405
  %422 = vst [vmem:[%s7 + $0x70] sm:$0xff] %v406
  %423 = vst [vmem:[%s7 + $0x78] sm:$0xff] %v407
  // Predicated region
  $region30: #{basic_block_forward.9} parent=0 // pred_check
    _
  $region31: #{basic_block_forward.9} parent=0 // pred_check_branch
    %425 = sbr.rel (0) target = $region33
  $region32: #{basic_block_forward.9} parent=0 // pred_region
    _
  $region33: #{basic_block_forward.9} parent=0 // pred_fallthru
    _
  // Predicated region
  $region34: #{basic_block_forward.9} parent=0 // pred_check
    _
  $region35: #{basic_block_forward.9} parent=0 // pred_check_branch
    %427 = sbr.rel (0) target = $region37
  $region36: #{basic_block_forward.9} parent=0 // pred_region
    _
  $region37: #{basic_block_forward.9} parent=0 // pred_fallthru
    _

</llo_original>
